<compile_context>
chip_gen: v7x
topology: tpu7x:2x2x1
jax: 0.10.0
libtpu: 0.0.40
codegen_flags: <defaults>
</compile_context>

<pallas_src>
import jax
import jax.numpy as jnp
from jax import lax
from jax.experimental import pallas as pl
from jax.experimental.pallas import tpu as pltpu

_LANE = 128


def _leaky(x, slope):
    return jnp.where(x > 0, x, slope * x)


def _mm(a, b):
    """MXU matmul (NN): bf16 operands, f32 accumulation."""
    return jnp.dot(a.astype(jnp.bfloat16), b.astype(jnp.bfloat16),
                   preferred_element_type=jnp.float32)


def _mm_nt(a, b):
    """MXU matmul a @ b.T (NT) without materializing the transpose."""
    return lax.dot_general(a.astype(jnp.bfloat16), b.astype(jnp.bfloat16),
                           dimension_numbers=(((1,), (1,)), ((), ())),
                           preferred_element_type=jnp.float32)


def slide_gcn_kernel(
    # data
    x_ref, h_ref, ea_ref,
    # hgc1
    w1_ref, a1x_ref, a1e_ref, b1_ref,
    # norm1
    g1w_ref, g1b_ref, g1m_ref,
    # fc1
    f1w_ref, f1b_ref,
    # hgc2
    w2_ref, a2x_ref, a2e_ref, b2_ref,
    # norm2
    g2w_ref, g2b_ref, g2m_ref,
    # fc2
    f2w_ref, f2b_ref,
    # attention MLP (aw1/ab1 pre-transposed in the wrapper: (N,N) / (N,1))
    aw1_ref, ab1_ref, aw2_ref, ab2_ref,
    # classifier (weights split per concat block, lane-padded to 128)
    cwx_ref, cw1_ref, cw2_ref, cb_ref,
    # output (N, out_pad)
    out_ref,
):
    x = x_ref[...]            # (N, F) f32
    H = h_ref[...]            # (N, E) incidence (0/1) f32
    ea = ea_ref[...]          # (E, F) hyperedge attrs

    # ---- incidence-only quantities: hoisted, shared by both conv layers ----
    mask = H > 0.0
    deg_n = jnp.sum(H, axis=1, keepdims=True)            # (N, 1) node degree
    deg_e = jnp.sum(H, axis=0, keepdims=True)            # (1, E) hyperedge degree
    d_inv = jnp.where(deg_n > 0,
                      pl.reciprocal(jnp.maximum(deg_n, 1.0), approx=True), 0.0)
    b_inv = jnp.where(deg_e > 0,
                      pl.reciprocal(jnp.maximum(deg_e, 1.0), approx=True), 0.0)

    def hypergraph_conv(feat, W, att_x, att_e, bias):
        # lin (no bias) on node features and hyperedge attrs
        xl = _mm(feat, W)                                 # (N, F)
        al = _mm(ea, W)                                   # (E, F)
        # attention logits per incidence: a_n (N,1) + a_e (1,E) -- no transposes
        a_n = jnp.sum(xl * att_x, axis=-1, keepdims=True)        # (N, 1) lane reduce
        a_e = _mm_nt(att_e, al)                                  # (1, E) NT matmul
        alpha = _leaky(a_n + a_e, 0.2)                           # (N, E)
        # softmax over nodes per hyperedge (attention_mode='node'), masked by H.
        # exp argument is clamped to <= 0 even at masked positions (overflow-safe).
        m = jnp.max(jnp.where(mask, alpha, -1e30), axis=0, keepdims=True)   # (1, E)
        ex = jnp.where(mask, jnp.exp(jnp.where(mask, alpha, m) - m), 0.0)
        den = jnp.sum(ex, axis=0, keepdims=True) + 1e-16
        w_inc = ex * pl.reciprocal(den, approx=True)             # (N, E), zero off-incidence
        # two-step propagation (node->edge->node) reassociated so only NN / NT
        # MXU matmuls are needed and B^-1 is folded in as a lane broadcast:
        #   out_n = D^-1 * ((w_inc * B^-1) @ w_inc^T) @ xl
        M = _mm_nt(w_inc * b_inv, w_inc)                         # (N, N)
        out_n = _mm(M, xl)                                       # (N, F)
        return d_inv * out_n + bias

    def graph_norm(feat, weight, bias, mean_scale):
        mean = jnp.mean(feat, axis=0, keepdims=True)
        out = feat - mean * mean_scale
        var = jnp.mean(out * out, axis=0, keepdims=True)
        return weight * out * lax.rsqrt(var + 1e-5) + bias       # EUP rsqrt

    # ---- column-attention MLP (transposed orientation: scores come out (1, C)) ----
    aw1 = aw1_ref[...]        # (N, N) = attn_w1^T (pre-transposed in the wrapper)
    ab1 = ab1_ref[...]        # (N, 1) = attn_b1^T
    aw2 = aw2_ref[...]        # (N, 1)
    ab2 = ab2_ref[...]        # (1, 1)

    def col_score(block):     # block: (N, C) -> per-column sigmoid scores (1, C)
        # h = relu(W1^T @ block + b1)  == relu(block^T @ W1 + b1)^T   (N, C)
        hh = jnp.maximum(_mm(aw1, block) + ab1, 0.0)
        # s = W2^T @ h + b2  == (h^T @ W2 + b2)^T                     (1, C)
        s = jnp.sum(aw2 * hh, axis=0, keepdims=True) + ab2
        # numerically-stable sigmoid via EUP exp + approx reciprocal
        z = jnp.exp(-jnp.abs(s))
        return jnp.where(s >= 0, 1.0, z) * pl.reciprocal(1.0 + z, approx=True)

    # Scores are computed as soon as their operand exists (shorter live ranges).
    sc_x = col_score(x)                                          # (1, F)

    # ---- branch 1 ----
    h1 = hypergraph_conv(x, w1_ref[...], a1x_ref[...], a1e_ref[...], b1_ref[...])
    h1 = _leaky(graph_norm(h1, g1w_ref[...], g1b_ref[...], g1m_ref[...]), 0.01)
    out1 = _leaky(_mm(h1, f1w_ref[...]) + f1b_ref[...], 0.01)    # (N, hid)
    sc_1 = col_score(out1)                                       # (1, hid)

    # ---- branch 2 ----
    h2 = hypergraph_conv(h1, w2_ref[...], a2x_ref[...], a2e_ref[...], b2_ref[...])
    h2 = _leaky(graph_norm(h2, g2w_ref[...], g2b_ref[...], g2m_ref[...]), 0.01)
    out2 = _leaky(_mm(h2, f2w_ref[...]) + f2b_ref[...], 0.01)    # (N, hid)
    sc_2 = col_score(out2)                                       # (1, hid)

    # mean over all columns of [x | out1 | out2]; kept 2-D (1,1) for Mosaic.
    total_cols = sc_x.shape[1] + sc_1.shape[1] + sc_2.shape[1]
    sum_sc = (jnp.sum(sc_x, keepdims=True) + jnp.sum(sc_1, keepdims=True)
              + jnp.sum(sc_2, keepdims=True))                    # (1, 1)
    mean_sc = sum_sc * (1.0 / total_cols)

    # classifier with weights split per concat block (no lane-unaligned concat);
    # out lane dim is padded to a multiple of 128 -> unmasked full-lane store.
    logits = (
        _mm(x * (sc_x - mean_sc), cwx_ref[...])
        + _mm(out1 * (sc_1 - mean_sc), cw1_ref[...])
        + _mm(out2 * (sc_2 - mean_sc), cw2_ref[...])
        + cb_ref[...]
    )
    out_ref[...] = logits


PARAM_ORDER = [
    "hgc1_w", "hgc1_att_x", "hgc1_att_e", "hgc1_b",
    "gn1_w", "gn1_b", "gn1_ms",
    "fc1_w", "fc1_b",
    "hgc2_w", "hgc2_att_x", "hgc2_att_e", "hgc2_b",
    "gn2_w", "gn2_b", "gn2_ms",
    "fc2_w", "fc2_b",
    "attn_w1", "attn_b1", "attn_w2", "attn_b2",
    "cls_w_x", "cls_w_1", "cls_w_2", "cls_b",
]


def init_params(key, feat_dim, num_node, out_dim):
    hid = feat_dim // 2
    ks = iter(jax.random.split(key, 24))

    def glorot(k, shape):
        lim = (6.0 / (shape[0] + shape[-1])) ** 0.5
        return jax.random.uniform(k, shape, jnp.float32, -lim, lim)

    p = {}
    for tag in ("1", "2"):
        p[f"hgc{tag}_w"] = glorot(next(ks), (feat_dim, feat_dim))
        p[f"hgc{tag}_att_x"] = glorot(next(ks), (1, feat_dim))
        p[f"hgc{tag}_att_e"] = glorot(next(ks), (1, feat_dim))
        p[f"hgc{tag}_b"] = jnp.zeros((1, feat_dim), jnp.float32)
        # GraphNorm default init: weight=1, bias=0, mean_scale=1
        p[f"gn{tag}_w"] = jnp.ones((1, feat_dim), jnp.float32)
        p[f"gn{tag}_b"] = jnp.zeros((1, feat_dim), jnp.float32)
        p[f"gn{tag}_ms"] = jnp.ones((1, feat_dim), jnp.float32)
        p[f"fc{tag}_w"] = glorot(next(ks), (feat_dim, hid))
        p[f"fc{tag}_b"] = 0.05 * jax.random.normal(next(ks), (1, hid), jnp.float32)

    p["attn_w1"] = glorot(next(ks), (num_node, num_node))
    p["attn_b1"] = 0.05 * jax.random.normal(next(ks), (1, num_node), jnp.float32)
    p["attn_w2"] = glorot(next(ks), (num_node, 1))
    p["attn_b2"] = jnp.zeros((1, 1), jnp.float32)

    cls_w = glorot(next(ks), (feat_dim + 2 * hid, out_dim))
    p["cls_w_x"] = cls_w[:feat_dim]
    p["cls_w_1"] = cls_w[feat_dim:feat_dim + hid]
    p["cls_w_2"] = cls_w[feat_dim + hid:]
    p["cls_b"] = 0.05 * jax.random.normal(next(ks), (1, out_dim), jnp.float32)
    return p


def slide_gcn_forward(x, edge_index, edge_attr, params):
    N, _ = x.shape
    E = edge_attr.shape[0]
    out_dim = params["cls_b"].shape[-1]
    out_pad = max(_LANE, ((out_dim + _LANE - 1) // _LANE) * _LANE)

    # Glue: densify the sparse hyperedge index into an incidence matrix.
    # TODO(synk): for large sparse graphs keep edge_index sparse and gather
    # per-hyperedge node tiles via PrefetchScalarGridSpec / manual DMA instead
    # of the dense (N, E) masked matmuls.
    H = jnp.zeros((N, E), jnp.float32).at[edge_index[0], edge_index[1]].set(1.0)

    def pad_lanes(w):
        return jnp.pad(w, ((0, 0), (0, out_pad - w.shape[-1])))

    # Outside-kernel layout plumbing (zero runtime cost inside the kernel):
    #  * attention MLP weight/bias pre-transposed so the kernel never transposes
    #  * classifier weights/bias zero-padded to a 128-wide lane dim
    pp = dict(params)
    pp["attn_w1"] = params["attn_w1"].T
    pp["attn_b1"] = params["attn_b1"].T
    pp["cls_w_x"] = pad_lanes(params["cls_w_x"])
    pp["cls_w_1"] = pad_lanes(params["cls_w_1"])
    pp["cls_w_2"] = pad_lanes(params["cls_w_2"])
    pp["cls_b"] = pad_lanes(params["cls_b"])

    inputs = [x, H, edge_attr] + [pp[k] for k in PARAM_ORDER]
    vmem = pl.BlockSpec(memory_space=pltpu.MemorySpace.VMEM)

    # TODO(synk): for realistic N (or a batch of graphs) tile over nodes/graphs
    # with a grid marked "parallel" and keep the (N,N) attention weight in HBM
    # via memory_space=pl.ANY + double-buffered DMA so the working set fits
    # v7x's 64 MiB VMEM.
    out = pl.pallas_call(
        slide_gcn_kernel,
        out_shape=jax.ShapeDtypeStruct((N, out_pad), jnp.float32),
        in_specs=[vmem] * len(inputs),
        out_specs=vmem,
        compiler_params=pltpu.CompilerParams(
            vmem_limit_bytes=32 * 1024 * 1024),
    )(*inputs)
    return out[:, :out_dim]


if __name__ == "__main__":
    num_node = 16      # N (attention MLP operates over the node axis -> N = num_node)
    feat_dim = 32      # F
    out_dim = 4
    num_edges = 6      # E hyperedges

    key = jax.random.PRNGKey(0)
    k_param, k_x, k_ea = jax.random.split(key, 3)

    params = init_params(k_param, feat_dim, num_node, out_dim)

    x = jax.random.normal(k_x, (num_node, feat_dim), jnp.float32)
    edge_attr = jax.random.normal(k_ea, (num_edges, feat_dim), jnp.float32)

    # deterministic hyperedges: edge e contains 4 distinct nodes
    rows = [(3 * e + k) % num_node for e in range(num_edges) for k in range(4)]
    cols = [e for e in range(num_edges) for _ in range(4)]
    edge_index = jnp.array([rows, cols], dtype=jnp.int32)

    logits = slide_gcn_forward(x, edge_index, edge_attr, params)
    jax.block_until_ready(logits)
    assert logits.shape == (num_node, out_dim)
    assert bool(jnp.all(jnp.isfinite(logits)))
    print("KERNEL_OK")
</pallas_src>

<mosaic_0001>
module attributes {stable_mosaic.version = 11 : i64} {
  func.func @slide_gcn_kernel(%arg0: memref<16x32xf32, #tpu.memory_space<vmem>>, %arg1: memref<16x6xf32, #tpu.memory_space<vmem>>, %arg2: memref<6x32xf32, #tpu.memory_space<vmem>>, %arg3: memref<32x32xf32, #tpu.memory_space<vmem>>, %arg4: memref<1x32xf32, #tpu.memory_space<vmem>>, %arg5: memref<1x32xf32, #tpu.memory_space<vmem>>, %arg6: memref<1x32xf32, #tpu.memory_space<vmem>>, %arg7: memref<1x32xf32, #tpu.memory_space<vmem>>, %arg8: memref<1x32xf32, #tpu.memory_space<vmem>>, %arg9: memref<1x32xf32, #tpu.memory_space<vmem>>, %arg10: memref<32x16xf32, #tpu.memory_space<vmem>>, %arg11: memref<1x16xf32, #tpu.memory_space<vmem>>, %arg12: memref<32x32xf32, #tpu.memory_space<vmem>>, %arg13: memref<1x32xf32, #tpu.memory_space<vmem>>, %arg14: memref<1x32xf32, #tpu.memory_space<vmem>>, %arg15: memref<1x32xf32, #tpu.memory_space<vmem>>, %arg16: memref<1x32xf32, #tpu.memory_space<vmem>>, %arg17: memref<1x32xf32, #tpu.memory_space<vmem>>, %arg18: memref<1x32xf32, #tpu.memory_space<vmem>>, %arg19: memref<32x16xf32, #tpu.memory_space<vmem>>, %arg20: memref<1x16xf32, #tpu.memory_space<vmem>>, %arg21: memref<16x16xf32, #tpu.memory_space<vmem>>, %arg22: memref<16x1xf32, #tpu.memory_space<vmem>>, %arg23: memref<16x1xf32, #tpu.memory_space<vmem>>, %arg24: memref<1x1xf32, #tpu.memory_space<vmem>>, %arg25: memref<32x128xf32, #tpu.memory_space<vmem>>, %arg26: memref<16x128xf32, #tpu.memory_space<vmem>>, %arg27: memref<16x128xf32, #tpu.memory_space<vmem>>, %arg28: memref<1x128xf32, #tpu.memory_space<vmem>>, %arg29: memref<16x128xf32, #tpu.memory_space<vmem>>) attributes {dimension_semantics = [], scalar_prefetch = 0 : i64, scratch_operands = 0 : i64, tpu.core_type = #tpu.core_type<tc>} {
    %c0 = arith.constant 0 : index
    %c0_0 = arith.constant 0 : index
    %0 = vector.load %arg0[%c0, %c0_0] : memref<16x32xf32, #tpu.memory_space<vmem>>, vector<16x32xf32>
    %c0_1 = arith.constant 0 : index
    %c0_2 = arith.constant 0 : index
    %1 = vector.load %arg1[%c0_1, %c0_2] : memref<16x6xf32, #tpu.memory_space<vmem>>, vector<16x6xf32>
    %c0_3 = arith.constant 0 : index
    %c0_4 = arith.constant 0 : index
    %2 = vector.load %arg2[%c0_3, %c0_4] : memref<6x32xf32, #tpu.memory_space<vmem>>, vector<6x32xf32>
    %cst = arith.constant 0.000000e+00 : f32
    %3 = vector.broadcast %cst : f32 to vector<16x6xf32>
    %4 = arith.cmpf ogt, %1, %3 : vector<16x6xf32>
    %cst_5 = arith.constant dense<0.000000e+00> : vector<16xf32>
    %5 = vector.multi_reduction <add>, %1, %cst_5 [1] : vector<16x6xf32> to vector<16xf32>
    %6 = vector.shape_cast %5 : vector<16xf32> to vector<16x1xf32>
    %cst_6 = arith.constant dense<0.000000e+00> : vector<6xf32>
    %7 = vector.multi_reduction <add>, %1, %cst_6 [0] : vector<16x6xf32> to vector<6xf32>
    %8 = vector.shape_cast %7 : vector<6xf32> to vector<1x6xf32>
    %cst_7 = arith.constant 0.000000e+00 : f32
    %9 = vector.broadcast %cst_7 : f32 to vector<16x1xf32>
    %10 = arith.cmpf ogt, %6, %9 : vector<16x1xf32>
    %cst_8 = arith.constant 1.000000e+00 : f32
    %11 = vector.broadcast %cst_8 : f32 to vector<16x1xf32>
    %12 = arith.maximumf %6, %11 : vector<16x1xf32>
    %13 = tpu.reciprocal %12 {approx = true} : vector<16x1xf32> -> vector<16x1xf32>
    %cst_9 = arith.constant 0.000000e+00 : f32
    %14 = vector.broadcast %cst_9 : f32 to vector<16x1xf32>
    %15 = arith.select %10, %13, %14 : vector<16x1xi1>, vector<16x1xf32>
    %cst_10 = arith.constant 0.000000e+00 : f32
    %16 = vector.broadcast %cst_10 : f32 to vector<1x6xf32>
    %17 = arith.cmpf ogt, %8, %16 : vector<1x6xf32>
    %cst_11 = arith.constant 1.000000e+00 : f32
    %18 = vector.broadcast %cst_11 : f32 to vector<1x6xf32>
    %19 = arith.maximumf %8, %18 : vector<1x6xf32>
    %20 = tpu.reciprocal %19 {approx = true} : vector<1x6xf32> -> vector<1x6xf32>
    %cst_12 = arith.constant 0.000000e+00 : f32
    %21 = vector.broadcast %cst_12 : f32 to vector<1x6xf32>
    %22 = arith.select %17, %20, %21 : vector<1x6xi1>, vector<1x6xf32>
    %c0_13 = arith.constant 0 : index
    %c0_14 = arith.constant 0 : index
    %23 = vector.load %arg21[%c0_13, %c0_14] : memref<16x16xf32, #tpu.memory_space<vmem>>, vector<16x16xf32>
    %c0_15 = arith.constant 0 : index
    %c0_16 = arith.constant 0 : index
    %24 = vector.load %arg22[%c0_15, %c0_16] : memref<16x1xf32, #tpu.memory_space<vmem>>, vector<16x1xf32>
    %c0_17 = arith.constant 0 : index
    %c0_18 = arith.constant 0 : index
    %25 = vector.load %arg23[%c0_17, %c0_18] : memref<16x1xf32, #tpu.memory_space<vmem>>, vector<16x1xf32>
    %c0_19 = arith.constant 0 : index
    %c0_20 = arith.constant 0 : index
    %26 = vector.load %arg24[%c0_19, %c0_20] : memref<1x1xf32, #tpu.memory_space<vmem>>, vector<1x1xf32>
    %27 = arith.truncf %23 : vector<16x16xf32> to vector<16x16xbf16>
    %28 = arith.truncf %0 : vector<16x32xf32> to vector<16x32xbf16>
    %cst_21 = arith.constant dense<0.000000e+00> : vector<16x32xf32>
    %29 = tpu.matmul %27, %28, %cst_21 {dimension_numbers = #tpu.dot_dimension_numbers<[1], [0], [0], [1], [0, 0, 1, 1], [], []>} : vector<16x16xbf16>, vector<16x32xbf16>, vector<16x32xf32> -> vector<16x32xf32>
    %30 = vector.broadcast %24 : vector<16x1xf32> to vector<16x32xf32>
    %31 = arith.addf %29, %30 : vector<16x32xf32>
    %cst_22 = arith.constant 0.000000e+00 : f32
    %32 = vector.broadcast %cst_22 : f32 to vector<16x32xf32>
    %33 = arith.maximumf %31, %32 : vector<16x32xf32>
    %34 = vector.broadcast %25 : vector<16x1xf32> to vector<16x32xf32>
    %35 = arith.mulf %34, %33 : vector<16x32xf32>
    %cst_23 = arith.constant dense<0.000000e+00> : vector<32xf32>
    %36 = vector.multi_reduction <add>, %35, %cst_23 [0] : vector<16x32xf32> to vector<32xf32>
    %37 = vector.shape_cast %36 : vector<32xf32> to vector<1x32xf32>
    %38 = vector.broadcast %26 : vector<1x1xf32> to vector<1x32xf32>
    %39 = arith.addf %37, %38 : vector<1x32xf32>
    %40 = math.absf %39 : vector<1x32xf32>
    %cst_24 = arith.constant 0.000000e+00 : f32
    %41 = vector.broadcast %cst_24 : f32 to vector<1x32xf32>
    %42 = arith.subf %41, %40 : vector<1x32xf32>
    %43 = math.exp %42 : vector<1x32xf32>
    %cst_25 = arith.constant 0.000000e+00 : f32
    %44 = vector.broadcast %cst_25 : f32 to vector<1x32xf32>
    %45 = arith.cmpf oge, %39, %44 : vector<1x32xf32>
    %cst_26 = arith.constant 1.000000e+00 : f32
    %46 = vector.broadcast %cst_26 : f32 to vector<1x32xf32>
    %47 = arith.select %45, %46, %43 : vector<1x32xi1>, vector<1x32xf32>
    %cst_27 = arith.constant 1.000000e+00 : f32
    %48 = vector.broadcast %cst_27 : f32 to vector<1x32xf32>
    %49 = arith.addf %48, %43 : vector<1x32xf32>
    %50 = tpu.reciprocal %49 {approx = true} : vector<1x32xf32> -> vector<1x32xf32>
    %51 = arith.mulf %47, %50 : vector<1x32xf32>
    %c0_28 = arith.constant 0 : index
    %c0_29 = arith.constant 0 : index
    %52 = vector.load %arg3[%c0_28, %c0_29] : memref<32x32xf32, #tpu.memory_space<vmem>>, vector<32x32xf32>
    %c0_30 = arith.constant 0 : index
    %c0_31 = arith.constant 0 : index
    %53 = vector.load %arg4[%c0_30, %c0_31] : memref<1x32xf32, #tpu.memory_space<vmem>>, vector<1x32xf32>
    %c0_32 = arith.constant 0 : index
    %c0_33 = arith.constant 0 : index
    %54 = vector.load %arg5[%c0_32, %c0_33] : memref<1x32xf32, #tpu.memory_space<vmem>>, vector<1x32xf32>
    %c0_34 = arith.constant 0 : index
    %c0_35 = arith.constant 0 : index
    %55 = vector.load %arg6[%c0_34, %c0_35] : memref<1x32xf32, #tpu.memory_space<vmem>>, vector<1x32xf32>
    %56 = arith.truncf %0 : vector<16x32xf32> to vector<16x32xbf16>
    %57 = arith.truncf %52 : vector<32x32xf32> to vector<32x32xbf16>
    %cst_36 = arith.constant dense<0.000000e+00> : vector<16x32xf32>
    %58 = tpu.matmul %56, %57, %cst_36 {dimension_numbers = #tpu.dot_dimension_numbers<[1], [0], [0], [1], [0, 0, 1, 1], [], []>} : vector<16x32xbf16>, vector<32x32xbf16>, vector<16x32xf32> -> vector<16x32xf32>
    %59 = arith.truncf %2 : vector<6x32xf32> to vector<6x32xbf16>
    %60 = arith.truncf %52 : vector<32x32xf32> to vector<32x32xbf16>
    %cst_37 = arith.constant dense<0.000000e+00> : vector<6x32xf32>
    %61 = tpu.matmul %59, %60, %cst_37 {dimension_numbers = #tpu.dot_dimension_numbers<[1], [0], [0], [1], [0, 0, 1, 1], [], []>} : vector<6x32xbf16>, vector<32x32xbf16>, vector<6x32xf32> -> vector<6x32xf32>
    %62 = vector.broadcast %53 : vector<1x32xf32> to vector<16x32xf32>
    %63 = arith.mulf %58, %62 : vector<16x32xf32>
    %cst_38 = arith.constant dense<0.000000e+00> : vector<16xf32>
    %64 = vector.multi_reduction <add>, %63, %cst_38 [1] : vector<16x32xf32> to vector<16xf32>
    %65 = vector.shape_cast %64 : vector<16xf32> to vector<16x1xf32>
    %66 = arith.truncf %54 : vector<1x32xf32> to vector<1x32xbf16>
    %67 = arith.truncf %61 : vector<6x32xf32> to vector<6x32xbf16>
    %cst_39 = arith.constant dense<0.000000e+00> : vector<1x6xf32>
    %68 = tpu.matmul %66, %67, %cst_39 {dimension_numbers = #tpu.dot_dimension_numbers<[1], [1], [0], [0], [0, 0, 1, 0], [], []>} : vector<1x32xbf16>, vector<6x32xbf16>, vector<1x6xf32> -> vector<1x6xf32>
    %69 = vector.broadcast %65 : vector<16x1xf32> to vector<16x6xf32>
    %70 = vector.broadcast %68 : vector<1x6xf32> to vector<16x6xf32>
    %71 = arith.addf %69, %70 : vector<16x6xf32>
    %cst_40 = arith.constant 0.000000e+00 : f32
    %72 = vector.broadcast %cst_40 : f32 to vector<16x6xf32>
    %73 = arith.cmpf ogt, %71, %72 : vector<16x6xf32>
    %cst_41 = arith.constant 2.000000e-01 : f32
    %74 = vector.broadcast %cst_41 : f32 to vector<16x6xf32>
    %75 = arith.mulf %74, %71 : vector<16x6xf32>
    %76 = arith.select %73, %71, %75 : vector<16x6xi1>, vector<16x6xf32>
    %cst_42 = arith.constant -1.000000e+30 : f32
    %77 = vector.broadcast %cst_42 : f32 to vector<16x6xf32>
    %78 = arith.select %4, %76, %77 : vector<16x6xi1>, vector<16x6xf32>
    %cst_43 = arith.constant dense<0xFF800000> : vector<6xf32>
    %79 = vector.multi_reduction <maximumf>, %78, %cst_43 [0] : vector<16x6xf32> to vector<6xf32>
    %80 = vector.shape_cast %79 : vector<6xf32> to vector<1x6xf32>
    %81 = vector.shape_cast %80 : vector<1x6xf32> to vector<1x6xf32>
    %82 = vector.broadcast %81 : vector<1x6xf32> to vector<16x6xf32>
    %83 = arith.select %4, %76, %82 : vector<16x6xi1>, vector<16x6xf32>
    %84 = vector.broadcast %80 : vector<1x6xf32> to vector<16x6xf32>
    %85 = arith.subf %83, %84 : vector<16x6xf32>
    %86 = math.exp %85 : vector<16x6xf32>
    %cst_44 = arith.constant 0.000000e+00 : f32
    %87 = vector.broadcast %cst_44 : f32 to vector<16x6xf32>
    %88 = arith.select %4, %86, %87 : vector<16x6xi1>, vector<16x6xf32>
    %cst_45 = arith.constant dense<0.000000e+00> : vector<6xf32>
    %89 = vector.multi_reduction <add>, %88, %cst_45 [0] : vector<16x6xf32> to vector<6xf32>
    %90 = vector.shape_cast %89 : vector<6xf32> to vector<1x6xf32>
    %cst_46 = arith.constant 1.000000e-16 : f32
    %91 = vector.broadcast %cst_46 : f32 to vector<1x6xf32>
    %92 = arith.addf %90, %91 : vector<1x6xf32>
    %93 = tpu.reciprocal %92 {approx = true} : vector<1x6xf32> -> vector<1x6xf32>
    %94 = vector.broadcast %93 : vector<1x6xf32> to vector<16x6xf32>
    %95 = arith.mulf %88, %94 : vector<16x6xf32>
    %96 = vector.broadcast %22 : vector<1x6xf32> to vector<16x6xf32>
    %97 = arith.mulf %95, %96 : vector<16x6xf32>
    %98 = arith.truncf %97 : vector<16x6xf32> to vector<16x6xbf16>
    %99 = arith.truncf %95 : vector<16x6xf32> to vector<16x6xbf16>
    %cst_47 = arith.constant dense<0.000000e+00> : vector<16x16xf32>
    %100 = tpu.matmul %98, %99, %cst_47 {dimension_numbers = #tpu.dot_dimension_numbers<[1], [1], [0], [0], [0, 0, 1, 0], [], []>} : vector<16x6xbf16>, vector<16x6xbf16>, vector<16x16xf32> -> vector<16x16xf32>
    %101 = arith.truncf %100 : vector<16x16xf32> to vector<16x16xbf16>
    %102 = arith.truncf %58 : vector<16x32xf32> to vector<16x32xbf16>
    %cst_48 = arith.constant dense<0.000000e+00> : vector<16x32xf32>
    %103 = tpu.matmul %101, %102, %cst_48 {dimension_numbers = #tpu.dot_dimension_numbers<[1], [0], [0], [1], [0, 0, 1, 1], [], []>} : vector<16x16xbf16>, vector<16x32xbf16>, vector<16x32xf32> -> vector<16x32xf32>
    %104 = vector.broadcast %15 : vector<16x1xf32> to vector<16x32xf32>
    %105 = arith.mulf %104, %103 : vector<16x32xf32>
    %106 = vector.broadcast %55 : vector<1x32xf32> to vector<16x32xf32>
    %107 = arith.addf %105, %106 : vector<16x32xf32>
    %c0_49 = arith.constant 0 : index
    %c0_50 = arith.constant 0 : index
    %108 = vector.load %arg7[%c0_49, %c0_50] : memref<1x32xf32, #tpu.memory_space<vmem>>, vector<1x32xf32>
    %c0_51 = arith.constant 0 : index
    %c0_52 = arith.constant 0 : index
    %109 = vector.load %arg8[%c0_51, %c0_52] : memref<1x32xf32, #tpu.memory_space<vmem>>, vector<1x32xf32>
    %c0_53 = arith.constant 0 : index
    %c0_54 = arith.constant 0 : index
    %110 = vector.load %arg9[%c0_53, %c0_54] : memref<1x32xf32, #tpu.memory_space<vmem>>, vector<1x32xf32>
    %cst_55 = arith.constant dense<0.000000e+00> : vector<32xf32>
    %111 = vector.multi_reduction <add>, %107, %cst_55 [0] : vector<16x32xf32> to vector<32xf32>
    %112 = vector.shape_cast %111 : vector<32xf32> to vector<1x32xf32>
    %cst_56 = arith.constant 1.600000e+01 : f32
    %113 = vector.broadcast %cst_56 : f32 to vector<1x32xf32>
    %114 = arith.divf %112, %113 : vector<1x32xf32>
    %115 = arith.mulf %114, %110 : vector<1x32xf32>
    %116 = vector.broadcast %115 : vector<1x32xf32> to vector<16x32xf32>
    %117 = arith.subf %107, %116 : vector<16x32xf32>
    %118 = arith.mulf %117, %117 : vector<16x32xf32>
    %cst_57 = arith.constant dense<0.000000e+00> : vector<32xf32>
    %119 = vector.multi_reduction <add>, %118, %cst_57 [0] : vector<16x32xf32> to vector<32xf32>
    %120 = vector.shape_cast %119 : vector<32xf32> to vector<1x32xf32>
    %cst_58 = arith.constant 1.600000e+01 : f32
    %121 = vector.broadcast %cst_58 : f32 to vector<1x32xf32>
    %122 = arith.divf %120, %121 : vector<1x32xf32>
    %123 = vector.broadcast %108 : vector<1x32xf32> to vector<16x32xf32>
    %124 = arith.mulf %123, %117 : vector<16x32xf32>
    %cst_59 = arith.constant 9.99999974E-6 : f32
    %125 = vector.broadcast %cst_59 : f32 to vector<1x32xf32>
    %126 = arith.addf %122, %125 : vector<1x32xf32>
    %127 = math.rsqrt %126 : vector<1x32xf32>
    %128 = vector.broadcast %127 : vector<1x32xf32> to vector<16x32xf32>
    %129 = arith.mulf %124, %128 : vector<16x32xf32>
    %130 = vector.broadcast %109 : vector<1x32xf32> to vector<16x32xf32>
    %131 = arith.addf %129, %130 : vector<16x32xf32>
    %cst_60 = arith.constant 0.000000e+00 : f32
    %132 = vector.broadcast %cst_60 : f32 to vector<16x32xf32>
    %133 = arith.cmpf ogt, %131, %132 : vector<16x32xf32>
    %cst_61 = arith.constant 0.00999999977 : f32
    %134 = vector.broadcast %cst_61 : f32 to vector<16x32xf32>
    %135 = arith.mulf %134, %131 : vector<16x32xf32>
    %136 = arith.select %133, %131, %135 : vector<16x32xi1>, vector<16x32xf32>
    %c0_62 = arith.constant 0 : index
    %c0_63 = arith.constant 0 : index
    %137 = vector.load %arg10[%c0_62, %c0_63] : memref<32x16xf32, #tpu.memory_space<vmem>>, vector<32x16xf32>
    %138 = arith.truncf %136 : vector<16x32xf32> to vector<16x32xbf16>
    %139 = arith.truncf %137 : vector<32x16xf32> to vector<32x16xbf16>
    %cst_64 = arith.constant dense<0.000000e+00> : vector<16x16xf32>
    %140 = tpu.matmul %138, %139, %cst_64 {dimension_numbers = #tpu.dot_dimension_numbers<[1], [0], [0], [1], [0, 0, 1, 1], [], []>} : vector<16x32xbf16>, vector<32x16xbf16>, vector<16x16xf32> -> vector<16x16xf32>
    %c0_65 = arith.constant 0 : index
    %c0_66 = arith.constant 0 : index
    %141 = vector.load %arg11[%c0_65, %c0_66] : memref<1x16xf32, #tpu.memory_space<vmem>>, vector<1x16xf32>
    %142 = vector.broadcast %141 : vector<1x16xf32> to vector<16x16xf32>
    %143 = arith.addf %140, %142 : vector<16x16xf32>
    %cst_67 = arith.constant 0.000000e+00 : f32
    %144 = vector.broadcast %cst_67 : f32 to vector<16x16xf32>
    %145 = arith.cmpf ogt, %143, %144 : vector<16x16xf32>
    %cst_68 = arith.constant 0.00999999977 : f32
    %146 = vector.broadcast %cst_68 : f32 to vector<16x16xf32>
    %147 = arith.mulf %146, %143 : vector<16x16xf32>
    %148 = arith.select %145, %143, %147 : vector<16x16xi1>, vector<16x16xf32>
    %149 = arith.truncf %23 : vector<16x16xf32> to vector<16x16xbf16>
    %150 = arith.truncf %148 : vector<16x16xf32> to vector<16x16xbf16>
    %cst_69 = arith.constant dense<0.000000e+00> : vector<16x16xf32>
    %151 = tpu.matmul %149, %150, %cst_69 {dimension_numbers = #tpu.dot_dimension_numbers<[1], [0], [0], [1], [0, 0, 1, 1], [], []>} : vector<16x16xbf16>, vector<16x16xbf16>, vector<16x16xf32> -> vector<16x16xf32>
    %152 = vector.broadcast %24 : vector<16x1xf32> to vector<16x16xf32>
    %153 = arith.addf %151, %152 : vector<16x16xf32>
    %cst_70 = arith.constant 0.000000e+00 : f32
    %154 = vector.broadcast %cst_70 : f32 to vector<16x16xf32>
    %155 = arith.maximumf %153, %154 : vector<16x16xf32>
    %156 = vector.broadcast %25 : vector<16x1xf32> to vector<16x16xf32>
    %157 = arith.mulf %156, %155 : vector<16x16xf32>
    %cst_71 = arith.constant dense<0.000000e+00> : vector<16xf32>
    %158 = vector.multi_reduction <add>, %157, %cst_71 [0] : vector<16x16xf32> to vector<16xf32>
    %159 = vector.shape_cast %158 : vector<16xf32> to vector<1x16xf32>
    %160 = vector.broadcast %26 : vector<1x1xf32> to vector<1x16xf32>
    %161 = arith.addf %159, %160 : vector<1x16xf32>
    %162 = math.absf %161 : vector<1x16xf32>
    %cst_72 = arith.constant 0.000000e+00 : f32
    %163 = vector.broadcast %cst_72 : f32 to vector<1x16xf32>
    %164 = arith.subf %163, %162 : vector<1x16xf32>
    %165 = math.exp %164 : vector<1x16xf32>
    %cst_73 = arith.constant 0.000000e+00 : f32
    %166 = vector.broadcast %cst_73 : f32 to vector<1x16xf32>
    %167 = arith.cmpf oge, %161, %166 : vector<1x16xf32>
    %cst_74 = arith.constant 1.000000e+00 : f32
    %168 = vector.broadcast %cst_74 : f32 to vector<1x16xf32>
    %169 = arith.select %167, %168, %165 : vector<1x16xi1>, vector<1x16xf32>
    %cst_75 = arith.constant 1.000000e+00 : f32
    %170 = vector.broadcast %cst_75 : f32 to vector<1x16xf32>
    %171 = arith.addf %170, %165 : vector<1x16xf32>
    %172 = tpu.reciprocal %171 {approx = true} : vector<1x16xf32> -> vector<1x16xf32>
    %173 = arith.mulf %169, %172 : vector<1x16xf32>
    %c0_76 = arith.constant 0 : index
    %c0_77 = arith.constant 0 : index
    %174 = vector.load %arg12[%c0_76, %c0_77] : memref<32x32xf32, #tpu.memory_space<vmem>>, vector<32x32xf32>
    %c0_78 = arith.constant 0 : index
    %c0_79 = arith.constant 0 : index
    %175 = vector.load %arg13[%c0_78, %c0_79] : memref<1x32xf32, #tpu.memory_space<vmem>>, vector<1x32xf32>
    %c0_80 = arith.constant 0 : index
    %c0_81 = arith.constant 0 : index
    %176 = vector.load %arg14[%c0_80, %c0_81] : memref<1x32xf32, #tpu.memory_space<vmem>>, vector<1x32xf32>
    %c0_82 = arith.constant 0 : index
    %c0_83 = arith.constant 0 : index
    %177 = vector.load %arg15[%c0_82, %c0_83] : memref<1x32xf32, #tpu.memory_space<vmem>>, vector<1x32xf32>
    %178 = arith.truncf %136 : vector<16x32xf32> to vector<16x32xbf16>
    %179 = arith.truncf %174 : vector<32x32xf32> to vector<32x32xbf16>
    %cst_84 = arith.constant dense<0.000000e+00> : vector<16x32xf32>
    %180 = tpu.matmul %178, %179, %cst_84 {dimension_numbers = #tpu.dot_dimension_numbers<[1], [0], [0], [1], [0, 0, 1, 1], [], []>} : vector<16x32xbf16>, vector<32x32xbf16>, vector<16x32xf32> -> vector<16x32xf32>
    %181 = arith.truncf %2 : vector<6x32xf32> to vector<6x32xbf16>
    %182 = arith.truncf %174 : vector<32x32xf32> to vector<32x32xbf16>
    %cst_85 = arith.constant dense<0.000000e+00> : vector<6x32xf32>
    %183 = tpu.matmul %181, %182, %cst_85 {dimension_numbers = #tpu.dot_dimension_numbers<[1], [0], [0], [1], [0, 0, 1, 1], [], []>} : vector<6x32xbf16>, vector<32x32xbf16>, vector<6x32xf32> -> vector<6x32xf32>
    %184 = vector.broadcast %175 : vector<1x32xf32> to vector<16x32xf32>
    %185 = arith.mulf %180, %184 : vector<16x32xf32>
    %cst_86 = arith.constant dense<0.000000e+00> : vector<16xf32>
    %186 = vector.multi_reduction <add>, %185, %cst_86 [1] : vector<16x32xf32> to vector<16xf32>
    %187 = vector.shape_cast %186 : vector<16xf32> to vector<16x1xf32>
    %188 = arith.truncf %176 : vector<1x32xf32> to vector<1x32xbf16>
    %189 = arith.truncf %183 : vector<6x32xf32> to vector<6x32xbf16>
    %cst_87 = arith.constant dense<0.000000e+00> : vector<1x6xf32>
    %190 = tpu.matmul %188, %189, %cst_87 {dimension_numbers = #tpu.dot_dimension_numbers<[1], [1], [0], [0], [0, 0, 1, 0], [], []>} : vector<1x32xbf16>, vector<6x32xbf16>, vector<1x6xf32> -> vector<1x6xf32>
    %191 = vector.broadcast %187 : vector<16x1xf32> to vector<16x6xf32>
    %192 = vector.broadcast %190 : vector<1x6xf32> to vector<16x6xf32>
    %193 = arith.addf %191, %192 : vector<16x6xf32>
    %cst_88 = arith.constant 0.000000e+00 : f32
    %194 = vector.broadcast %cst_88 : f32 to vector<16x6xf32>
    %195 = arith.cmpf ogt, %193, %194 : vector<16x6xf32>
    %cst_89 = arith.constant 2.000000e-01 : f32
    %196 = vector.broadcast %cst_89 : f32 to vector<16x6xf32>
    %197 = arith.mulf %196, %193 : vector<16x6xf32>
    %198 = arith.select %195, %193, %197 : vector<16x6xi1>, vector<16x6xf32>
    %cst_90 = arith.constant -1.000000e+30 : f32
    %199 = vector.broadcast %cst_90 : f32 to vector<16x6xf32>
    %200 = arith.select %4, %198, %199 : vector<16x6xi1>, vector<16x6xf32>
    %cst_91 = arith.constant dense<0xFF800000> : vector<6xf32>
    %201 = vector.multi_reduction <maximumf>, %200, %cst_91 [0] : vector<16x6xf32> to vector<6xf32>
    %202 = vector.shape_cast %201 : vector<6xf32> to vector<1x6xf32>
    %203 = vector.shape_cast %202 : vector<1x6xf32> to vector<1x6xf32>
    %204 = vector.broadcast %203 : vector<1x6xf32> to vector<16x6xf32>
    %205 = arith.select %4, %198, %204 : vector<16x6xi1>, vector<16x6xf32>
    %206 = vector.broadcast %202 : vector<1x6xf32> to vector<16x6xf32>
    %207 = arith.subf %205, %206 : vector<16x6xf32>
    %208 = math.exp %207 : vector<16x6xf32>
    %cst_92 = arith.constant 0.000000e+00 : f32
    %209 = vector.broadcast %cst_92 : f32 to vector<16x6xf32>
    %210 = arith.select %4, %208, %209 : vector<16x6xi1>, vector<16x6xf32>
    %cst_93 = arith.constant dense<0.000000e+00> : vector<6xf32>
    %211 = vector.multi_reduction <add>, %210, %cst_93 [0] : vector<16x6xf32> to vector<6xf32>
    %212 = vector.shape_cast %211 : vector<6xf32> to vector<1x6xf32>
    %cst_94 = arith.constant 1.000000e-16 : f32
    %213 = vector.broadcast %cst_94 : f32 to vector<1x6xf32>
    %214 = arith.addf %212, %213 : vector<1x6xf32>
    %215 = tpu.reciprocal %214 {approx = true} : vector<1x6xf32> -> vector<1x6xf32>
    %216 = vector.broadcast %215 : vector<1x6xf32> to vector<16x6xf32>
    %217 = arith.mulf %210, %216 : vector<16x6xf32>
    %218 = vector.broadcast %22 : vector<1x6xf32> to vector<16x6xf32>
    %219 = arith.mulf %217, %218 : vector<16x6xf32>
    %220 = arith.truncf %219 : vector<16x6xf32> to vector<16x6xbf16>
    %221 = arith.truncf %217 : vector<16x6xf32> to vector<16x6xbf16>
    %cst_95 = arith.constant dense<0.000000e+00> : vector<16x16xf32>
    %222 = tpu.matmul %220, %221, %cst_95 {dimension_numbers = #tpu.dot_dimension_numbers<[1], [1], [0], [0], [0, 0, 1, 0], [], []>} : vector<16x6xbf16>, vector<16x6xbf16>, vector<16x16xf32> -> vector<16x16xf32>
    %223 = arith.truncf %222 : vector<16x16xf32> to vector<16x16xbf16>
    %224 = arith.truncf %180 : vector<16x32xf32> to vector<16x32xbf16>
    %cst_96 = arith.constant dense<0.000000e+00> : vector<16x32xf32>
    %225 = tpu.matmul %223, %224, %cst_96 {dimension_numbers = #tpu.dot_dimension_numbers<[1], [0], [0], [1], [0, 0, 1, 1], [], []>} : vector<16x16xbf16>, vector<16x32xbf16>, vector<16x32xf32> -> vector<16x32xf32>
    %226 = vector.broadcast %15 : vector<16x1xf32> to vector<16x32xf32>
    %227 = arith.mulf %226, %225 : vector<16x32xf32>
    %228 = vector.broadcast %177 : vector<1x32xf32> to vector<16x32xf32>
    %229 = arith.addf %227, %228 : vector<16x32xf32>
    %c0_97 = arith.constant 0 : index
    %c0_98 = arith.constant 0 : index
    %230 = vector.load %arg16[%c0_97, %c0_98] : memref<1x32xf32, #tpu.memory_space<vmem>>, vector<1x32xf32>
    %c0_99 = arith.constant 0 : index
    %c0_100 = arith.constant 0 : index
    %231 = vector.load %arg17[%c0_99, %c0_100] : memref<1x32xf32, #tpu.memory_space<vmem>>, vector<1x32xf32>
    %c0_101 = arith.constant 0 : index
    %c0_102 = arith.constant 0 : index
    %232 = vector.load %arg18[%c0_101, %c0_102] : memref<1x32xf32, #tpu.memory_space<vmem>>, vector<1x32xf32>
    %cst_103 = arith.constant dense<0.000000e+00> : vector<32xf32>
    %233 = vector.multi_reduction <add>, %229, %cst_103 [0] : vector<16x32xf32> to vector<32xf32>
    %234 = vector.shape_cast %233 : vector<32xf32> to vector<1x32xf32>
    %cst_104 = arith.constant 1.600000e+01 : f32
    %235 = vector.broadcast %cst_104 : f32 to vector<1x32xf32>
    %236 = arith.divf %234, %235 : vector<1x32xf32>
    %237 = arith.mulf %236, %232 : vector<1x32xf32>
    %238 = vector.broadcast %237 : vector<1x32xf32> to vector<16x32xf32>
    %239 = arith.subf %229, %238 : vector<16x32xf32>
    %240 = arith.mulf %239, %239 : vector<16x32xf32>
    %cst_105 = arith.constant dense<0.000000e+00> : vector<32xf32>
    %241 = vector.multi_reduction <add>, %240, %cst_105 [0] : vector<16x32xf32> to vector<32xf32>
    %242 = vector.shape_cast %241 : vector<32xf32> to vector<1x32xf32>
    %cst_106 = arith.constant 1.600000e+01 : f32
    %243 = vector.broadcast %cst_106 : f32 to vector<1x32xf32>
    %244 = arith.divf %242, %243 : vector<1x32xf32>
    %245 = vector.broadcast %230 : vector<1x32xf32> to vector<16x32xf32>
    %246 = arith.mulf %245, %239 : vector<16x32xf32>
    %cst_107 = arith.constant 9.99999974E-6 : f32
    %247 = vector.broadcast %cst_107 : f32 to vector<1x32xf32>
    %248 = arith.addf %244, %247 : vector<1x32xf32>
    %249 = math.rsqrt %248 : vector<1x32xf32>
    %250 = vector.broadcast %249 : vector<1x32xf32> to vector<16x32xf32>
    %251 = arith.mulf %246, %250 : vector<16x32xf32>
    %252 = vector.broadcast %231 : vector<1x32xf32> to vector<16x32xf32>
    %253 = arith.addf %251, %252 : vector<16x32xf32>
    %cst_108 = arith.constant 0.000000e+00 : f32
    %254 = vector.broadcast %cst_108 : f32 to vector<16x32xf32>
    %255 = arith.cmpf ogt, %253, %254 : vector<16x32xf32>
    %cst_109 = arith.constant 0.00999999977 : f32
    %256 = vector.broadcast %cst_109 : f32 to vector<16x32xf32>
    %257 = arith.mulf %256, %253 : vector<16x32xf32>
    %258 = arith.select %255, %253, %257 : vector<16x32xi1>, vector<16x32xf32>
    %c0_110 = arith.constant 0 : index
    %c0_111 = arith.constant 0 : index
    %259 = vector.load %arg19[%c0_110, %c0_111] : memref<32x16xf32, #tpu.memory_space<vmem>>, vector<32x16xf32>
    %260 = arith.truncf %258 : vector<16x32xf32> to vector<16x32xbf16>
    %261 = arith.truncf %259 : vector<32x16xf32> to vector<32x16xbf16>
    %cst_112 = arith.constant dense<0.000000e+00> : vector<16x16xf32>
    %262 = tpu.matmul %260, %261, %cst_112 {dimension_numbers = #tpu.dot_dimension_numbers<[1], [0], [0], [1], [0, 0, 1, 1], [], []>} : vector<16x32xbf16>, vector<32x16xbf16>, vector<16x16xf32> -> vector<16x16xf32>
    %c0_113 = arith.constant 0 : index
    %c0_114 = arith.constant 0 : index
    %263 = vector.load %arg20[%c0_113, %c0_114] : memref<1x16xf32, #tpu.memory_space<vmem>>, vector<1x16xf32>
    %264 = vector.broadcast %263 : vector<1x16xf32> to vector<16x16xf32>
    %265 = arith.addf %262, %264 : vector<16x16xf32>
    %cst_115 = arith.constant 0.000000e+00 : f32
    %266 = vector.broadcast %cst_115 : f32 to vector<16x16xf32>
    %267 = arith.cmpf ogt, %265, %266 : vector<16x16xf32>
    %cst_116 = arith.constant 0.00999999977 : f32
    %268 = vector.broadcast %cst_116 : f32 to vector<16x16xf32>
    %269 = arith.mulf %268, %265 : vector<16x16xf32>
    %270 = arith.select %267, %265, %269 : vector<16x16xi1>, vector<16x16xf32>
    %271 = arith.truncf %23 : vector<16x16xf32> to vector<16x16xbf16>
    %272 = arith.truncf %270 : vector<16x16xf32> to vector<16x16xbf16>
    %cst_117 = arith.constant dense<0.000000e+00> : vector<16x16xf32>
    %273 = tpu.matmul %271, %272, %cst_117 {dimension_numbers = #tpu.dot_dimension_numbers<[1], [0], [0], [1], [0, 0, 1, 1], [], []>} : vector<16x16xbf16>, vector<16x16xbf16>, vector<16x16xf32> -> vector<16x16xf32>
    %274 = vector.broadcast %24 : vector<16x1xf32> to vector<16x16xf32>
    %275 = arith.addf %273, %274 : vector<16x16xf32>
    %cst_118 = arith.constant 0.000000e+00 : f32
    %276 = vector.broadcast %cst_118 : f32 to vector<16x16xf32>
    %277 = arith.maximumf %275, %276 : vector<16x16xf32>
    %278 = vector.broadcast %25 : vector<16x1xf32> to vector<16x16xf32>
    %279 = arith.mulf %278, %277 : vector<16x16xf32>
    %cst_119 = arith.constant dense<0.000000e+00> : vector<16xf32>
    %280 = vector.multi_reduction <add>, %279, %cst_119 [0] : vector<16x16xf32> to vector<16xf32>
    %281 = vector.shape_cast %280 : vector<16xf32> to vector<1x16xf32>
    %282 = vector.broadcast %26 : vector<1x1xf32> to vector<1x16xf32>
    %283 = arith.addf %281, %282 : vector<1x16xf32>
    %284 = math.absf %283 : vector<1x16xf32>
    %cst_120 = arith.constant 0.000000e+00 : f32
    %285 = vector.broadcast %cst_120 : f32 to vector<1x16xf32>
    %286 = arith.subf %285, %284 : vector<1x16xf32>
    %287 = math.exp %286 : vector<1x16xf32>
    %cst_121 = arith.constant 0.000000e+00 : f32
    %288 = vector.broadcast %cst_121 : f32 to vector<1x16xf32>
    %289 = arith.cmpf oge, %283, %288 : vector<1x16xf32>
    %cst_122 = arith.constant 1.000000e+00 : f32
    %290 = vector.broadcast %cst_122 : f32 to vector<1x16xf32>
    %291 = arith.select %289, %290, %287 : vector<1x16xi1>, vector<1x16xf32>
    %cst_123 = arith.constant 1.000000e+00 : f32
    %292 = vector.broadcast %cst_123 : f32 to vector<1x16xf32>
    %293 = arith.addf %292, %287 : vector<1x16xf32>
    %294 = tpu.reciprocal %293 {approx = true} : vector<1x16xf32> -> vector<1x16xf32>
    %295 = arith.mulf %291, %294 : vector<1x16xf32>
    %296 = vector.shape_cast %51 : vector<1x32xf32> to vector<1x1x32xf32>
    %cst_124 = arith.constant dense<0.000000e+00> : vector<1xf32>
    %297 = vector.multi_reduction <add>, %296, %cst_124 [1, 2] : vector<1x1x32xf32> to vector<1xf32>
    %298 = vector.shape_cast %297 : vector<1xf32> to vector<1x1x1xf32>
    %299 = vector.extract %298[0, 0, 0] : f32 from vector<1x1x1xf32>
    %300 = vector.broadcast %299 : f32 to vector<1x1xf32>
    %301 = vector.shape_cast %173 : vector<1x16xf32> to vector<1x1x16xf32>
    %cst_125 = arith.constant dense<0.000000e+00> : vector<1xf32>
    %302 = vector.multi_reduction <add>, %301, %cst_125 [1, 2] : vector<1x1x16xf32> to vector<1xf32>
    %303 = vector.shape_cast %302 : vector<1xf32> to vector<1x1x1xf32>
    %304 = vector.extract %303[0, 0, 0] : f32 from vector<1x1x1xf32>
    %305 = vector.broadcast %304 : f32 to vector<1x1xf32>
    %306 = arith.addf %300, %305 : vector<1x1xf32>
    %307 = vector.shape_cast %295 : vector<1x16xf32> to vector<1x1x16xf32>
    %cst_126 = arith.constant dense<0.000000e+00> : vector<1xf32>
    %308 = vector.multi_reduction <add>, %307, %cst_126 [1, 2] : vector<1x1x16xf32> to vector<1xf32>
    %309 = vector.shape_cast %308 : vector<1xf32> to vector<1x1x1xf32>
    %310 = vector.extract %309[0, 0, 0] : f32 from vector<1x1x1xf32>
    %311 = vector.broadcast %310 : f32 to vector<1x1xf32>
    %312 = arith.addf %306, %311 : vector<1x1xf32>
    %cst_127 = arith.constant 1.562500e-02 : f32
    %313 = vector.broadcast %cst_127 : f32 to vector<1x1xf32>
    %314 = arith.mulf %312, %313 : vector<1x1xf32>
    %315 = vector.broadcast %314 : vector<1x1xf32> to vector<1x32xf32>
    %316 = arith.subf %51, %315 : vector<1x32xf32>
    %317 = vector.broadcast %316 : vector<1x32xf32> to vector<16x32xf32>
    %318 = arith.mulf %0, %317 : vector<16x32xf32>
    %c0_128 = arith.constant 0 : index
    %c0_129 = arith.constant 0 : index
    %319 = vector.load %arg25[%c0_128, %c0_129] : memref<32x128xf32, #tpu.memory_space<vmem>>, vector<32x128xf32>
    %320 = arith.truncf %318 : vector<16x32xf32> to vector<16x32xbf16>
    %321 = arith.truncf %319 : vector<32x128xf32> to vector<32x128xbf16>
    %cst_130 = arith.constant dense<0.000000e+00> : vector<16x128xf32>
    %322 = tpu.matmul %320, %321, %cst_130 {dimension_numbers = #tpu.dot_dimension_numbers<[1], [0], [0], [1], [0, 0, 1, 1], [], []>} : vector<16x32xbf16>, vector<32x128xbf16>, vector<16x128xf32> -> vector<16x128xf32>
    %323 = vector.broadcast %314 : vector<1x1xf32> to vector<1x16xf32>
    %324 = arith.subf %173, %323 : vector<1x16xf32>
    %325 = vector.broadcast %324 : vector<1x16xf32> to vector<16x16xf32>
    %326 = arith.mulf %148, %325 : vector<16x16xf32>
    %c0_131 = arith.constant 0 : index
    %c0_132 = arith.constant 0 : index
    %327 = vector.load %arg26[%c0_131, %c0_132] : memref<16x128xf32, #tpu.memory_space<vmem>>, vector<16x128xf32>
    %328 = arith.truncf %326 : vector<16x16xf32> to vector<16x16xbf16>
    %329 = arith.truncf %327 : vector<16x128xf32> to vector<16x128xbf16>
    %cst_133 = arith.constant dense<0.000000e+00> : vector<16x128xf32>
    %330 = tpu.matmul %328, %329, %cst_133 {dimension_numbers = #tpu.dot_dimension_numbers<[1], [0], [0], [1], [0, 0, 1, 1], [], []>} : vector<16x16xbf16>, vector<16x128xbf16>, vector<16x128xf32> -> vector<16x128xf32>
    %331 = arith.addf %322, %330 : vector<16x128xf32>
    %332 = vector.broadcast %314 : vector<1x1xf32> to vector<1x16xf32>
    %333 = arith.subf %295, %332 : vector<1x16xf32>
    %334 = vector.broadcast %333 : vector<1x16xf32> to vector<16x16xf32>
    %335 = arith.mulf %270, %334 : vector<16x16xf32>
    %c0_134 = arith.constant 0 : index
    %c0_135 = arith.constant 0 : index
    %336 = vector.load %arg27[%c0_134, %c0_135] : memref<16x128xf32, #tpu.memory_space<vmem>>, vector<16x128xf32>
    %337 = arith.truncf %335 : vector<16x16xf32> to vector<16x16xbf16>
    %338 = arith.truncf %336 : vector<16x128xf32> to vector<16x128xbf16>
    %cst_136 = arith.constant dense<0.000000e+00> : vector<16x128xf32>
    %339 = tpu.matmul %337, %338, %cst_136 {dimension_numbers = #tpu.dot_dimension_numbers<[1], [0], [0], [1], [0, 0, 1, 1], [], []>} : vector<16x16xbf16>, vector<16x128xbf16>, vector<16x128xf32> -> vector<16x128xf32>
    %340 = arith.addf %331, %339 : vector<16x128xf32>
    %c0_137 = arith.constant 0 : index
    %c0_138 = arith.constant 0 : index
    %341 = vector.load %arg28[%c0_137, %c0_138] : memref<1x128xf32, #tpu.memory_space<vmem>>, vector<1x128xf32>
    %342 = vector.broadcast %341 : vector<1x128xf32> to vector<16x128xf32>
    %343 = arith.addf %340, %342 : vector<16x128xf32>
    %c0_139 = arith.constant 0 : index
    %c0_140 = arith.constant 0 : index
    %344 = vector.load %arg29[%c0_139, %c0_140] : memref<16x128xf32, #tpu.memory_space<vmem>>, vector<16x128xf32>
    tpu.vector_store %arg29[%c0_139, %c0_140], %343 {strides = array<i32>} : memref<16x128xf32, #tpu.memory_space<vmem>>, vector<16x128xf32>,
    return
  }
}

</mosaic_0001>

<llo_original>
// kernel: tpu_custom_call.1
$region0: #{tpu_custom_call.1}
  #allocation0 [shape = 'u32[]', space=smem, size = 0x4, offset = 0x4, fixed_abs, tag = 'smem constant byte address 0x4 - core index']
  #allocation1 [shape = 'u32[144,128]{1,0:T(1,128)}', space=vmem, size = 0x12000, scoped, tag = 'internal scratch']
  #allocation2 [shape = 'f32[1,1]{1,0:T(1,128)S(1)}', space=vmem, size = 0x200, scoped, tag = 'scoped memory for tpu_custom_call.1']
  %s0 = inlined_call_operand.smem [shape: u32[30], index: -1, kind: input, shape index: {}]
  %s1 = sld [smem:[%s0]]
  %s2 = scalar_lea.smem %s0, 1
  %s3 = sld [smem:[%s2]]
  %s4 = scalar_lea.smem %s0, 2
  %s5 = sld [smem:[%s4]]
  %s6 = scalar_lea.smem %s0, 3
  %s7 = sld [smem:[%s6]]
  %s8 = scalar_lea.smem %s0, 4
  %s9 = sld [smem:[%s8]]
  %s10 = scalar_lea.smem %s0, 5
  %s11 = sld [smem:[%s10]]
  %s12 = scalar_lea.smem %s0, 6
  %s13 = sld [smem:[%s12]]
  %s14 = scalar_lea.smem %s0, 7
  %s15 = sld [smem:[%s14]]
  %s16 = scalar_lea.smem %s0, 8
  %s17 = sld [smem:[%s16]]
  %s18 = scalar_lea.smem %s0, 9
  %s19 = sld [smem:[%s18]]
  %s20 = scalar_lea.smem %s0, 10
  %s21 = sld [smem:[%s20]]
  %s22 = scalar_lea.smem %s0, 11
  %s23 = sld [smem:[%s22]]
  %s24 = scalar_lea.smem %s0, 12
  %s25 = sld [smem:[%s24]]
  %s26 = scalar_lea.smem %s0, 13
  %s27 = sld [smem:[%s26]]
  %s28 = scalar_lea.smem %s0, 14
  %s29 = sld [smem:[%s28]]
  %s30 = scalar_lea.smem %s0, 15
  %s31 = sld [smem:[%s30]]
  %s32 = scalar_lea.smem %s0, 16
  %s33 = sld [smem:[%s32]]
  %s34 = scalar_lea.smem %s0, 17
  %s35 = sld [smem:[%s34]]
  %s36 = scalar_lea.smem %s0, 18
  %s37 = sld [smem:[%s36]]
  %s38 = scalar_lea.smem %s0, 19
  %s39 = sld [smem:[%s38]]
  %s40 = scalar_lea.smem %s0, 20
  %s41 = sld [smem:[%s40]]
  %s42 = scalar_lea.smem %s0, 21
  %s43 = sld [smem:[%s42]]
  %s44 = scalar_lea.smem %s0, 22
  %s45 = sld [smem:[%s44]]
  %s46 = scalar_lea.smem %s0, 23
  %s47 = sld [smem:[%s46]]
  %s48 = scalar_lea.smem %s0, 24
  %s49 = sld [smem:[%s48]]
  %s50 = scalar_lea.smem %s0, 25
  %s51 = sld [smem:[%s50]]
  %s52 = scalar_lea.smem %s0, 26
  %s53 = sld [smem:[%s52]]
  %s54 = scalar_lea.smem %s0, 27
  %s55 = sld [smem:[%s54]]
  %s56 = scalar_lea.smem %s0, 28
  %s57 = sld [smem:[%s56]]
  %s58 = scalar_lea.smem %s0, 29
  %s59 = sld [smem:[%s58]]
  %s60 = sld [smem:[#allocation0]]
  $region142: #{tpu_custom_call.1} parent=0
    _
  %s62 = ssub.s32 1, %s60
  %s63 = scalar_select 0, %s62, %s60
  %v64 = vstv %s49
  %65 = vst [vmem:[#allocation2] sm:$0x1] %v64
  $region1: #{tpu_custom_call.1} parent=0
    #allocation3 [shape = 'u8[4096]{0}', space=vmem, size = 0x1000, scoped, tag = 'input window, operand 2, single buffered']
    #allocation4 [shape = 's32[1]{0}', space=sflag, size = 0x4, scoped, tag = 'scoped memory for tpu_custom_call.1']
    #allocation5 [shape = 's32[1]{0}', space=sflag, size = 0x4, scoped, tag = 'scoped memory for tpu_custom_call.1']
    #allocation6 [shape = 'u8[512]{0}', space=vmem, size = 0x400, scoped, tag = 'input window, operand 4, single buffered']
    #allocation7 [shape = 's32[1]{0}', space=sflag, size = 0x4, scoped, tag = 'scoped memory for tpu_custom_call.1']
    #allocation8 [shape = 'u8[512]{0}', space=vmem, size = 0x400, scoped, tag = 'input window, operand 5, single buffered']
    #allocation9 [shape = 'u8[512]{0}', space=vmem, size = 0x400, scoped, tag = 'input window, operand 9, single buffered']
    #allocation10 [shape = 's32[1]{0}', space=sflag, size = 0x4, scoped, tag = 'scoped memory for tpu_custom_call.1']
    #allocation11 [shape = 'u8[8192]{0}', space=vmem, size = 0x2000, scoped, tag = 'output window, operand 0, single buffered']
    %66 = vsyncpa [#allocation4], 0
    %67 = vsyncpa [#allocation7], 0
    %68 = vsyncpa [#allocation10], 0
    %69 = vsyncpa [#allocation5], 0
    // Predicated region
    $region2: #{tpu_custom_call.1} parent=1 // pred_check
      _
    $region3: #{tpu_custom_call.1} parent=1 // pred_check_branch
      %71 = sbr.rel (0) target = $region5
    $region4: #{tpu_custom_call.1} parent=1 // pred_region
      _
    $region5: #{tpu_custom_call.1} parent=1 // pred_fallthru
      _
    // Predicated region
    $region6: #{tpu_custom_call.1} parent=1 // pred_check
      _
    $region7: #{tpu_custom_call.1} parent=1 // pred_check_branch
      %73 = sbr.rel (0) target = $region9
    $region8: #{tpu_custom_call.1} parent=1 // pred_region
      _
    $region9: #{tpu_custom_call.1} parent=1 // pred_fallthru
      _
    // Predicated region
    $region10: #{tpu_custom_call.1} parent=1 // pred_check
      _
    $region11: #{tpu_custom_call.1} parent=1 // pred_check_branch
      %75 = sbr.rel (0) target = $region13
    $region12: #{tpu_custom_call.1} parent=1 // pred_region
      %s77 = ssub.s32 128, 128
      %78 = vsyncadd [#allocation4], %s77
      %s80 = sshll.u32 [#allocation3], 4
      %s81 = int_to_ptr.vmem [resolvable:$true] %s80
      %83 = dma.hbm_to_vmem [thread:$0]  %s5, 128, %s81, [#allocation4]
    $region13: #{tpu_custom_call.1} parent=1 // pred_fallthru
      _
    // Predicated region
    $region14: #{tpu_custom_call.1} parent=1 // pred_check
      _
    $region15: #{tpu_custom_call.1} parent=1 // pred_check_branch
      %85 = sbr.rel (0) target = $region17
    $region16: #{tpu_custom_call.1} parent=1 // pred_region
      _
    $region17: #{tpu_custom_call.1} parent=1 // pred_fallthru
      _
    // Predicated region
    $region18: #{tpu_custom_call.1} parent=1 // pred_check
      _
    $region19: #{tpu_custom_call.1} parent=1 // pred_check_branch
      %87 = sbr.rel (0) target = $region21
    $region20: #{tpu_custom_call.1} parent=1 // pred_region
      %s89 = ssub.s32 16, 16
      %90 = vsyncadd [#allocation7], %s89
      %s92 = sshll.u32 [#allocation6], 4
      %s93 = int_to_ptr.vmem [resolvable:$true] %s92
      %95 = dma.hbm_to_vmem [thread:$0]  %s9, 16, %s93, [#allocation7]
    $region21: #{tpu_custom_call.1} parent=1 // pred_fallthru
      _
    // Predicated region
    $region22: #{tpu_custom_call.1} parent=1 // pred_check
      _
    $region23: #{tpu_custom_call.1} parent=1 // pred_check_branch
      %97 = sbr.rel (0) target = $region25
    $region24: #{tpu_custom_call.1} parent=1 // pred_region
      %s99 = ssub.s32 16, 16
      %100 = vsyncadd [#allocation7], %s99
      %s102 = sshll.u32 [#allocation8], 4
      %s103 = int_to_ptr.vmem [resolvable:$true] %s102
      %105 = dma.hbm_to_vmem [thread:$0]  %s11, 16, %s103, [#allocation7]
    $region25: #{tpu_custom_call.1} parent=1 // pred_fallthru
      _
    // Predicated region
    $region26: #{tpu_custom_call.1} parent=1 // pred_check
      _
    $region27: #{tpu_custom_call.1} parent=1 // pred_check_branch
      %107 = sbr.rel (0) target = $region29
    $region28: #{tpu_custom_call.1} parent=1 // pred_region
      _
    $region29: #{tpu_custom_call.1} parent=1 // pred_fallthru
      _
    // Predicated region
    $region30: #{tpu_custom_call.1} parent=1 // pred_check
      _
    $region31: #{tpu_custom_call.1} parent=1 // pred_check_branch
      %109 = sbr.rel (0) target = $region33
    $region32: #{tpu_custom_call.1} parent=1 // pred_region
      _
    $region33: #{tpu_custom_call.1} parent=1 // pred_fallthru
      _
    // Predicated region
    $region34: #{tpu_custom_call.1} parent=1 // pred_check
      _
    $region35: #{tpu_custom_call.1} parent=1 // pred_check_branch
      %111 = sbr.rel (0) target = $region37
    $region36: #{tpu_custom_call.1} parent=1 // pred_region
      _
    $region37: #{tpu_custom_call.1} parent=1 // pred_fallthru
      _
    // Predicated region
    $region38: #{tpu_custom_call.1} parent=1 // pred_check
      _
    $region39: #{tpu_custom_call.1} parent=1 // pred_check_branch
      %113 = sbr.rel (0) target = $region41
    $region40: #{tpu_custom_call.1} parent=1 // pred_region
      %s115 = ssub.s32 16, 16
      %116 = vsyncadd [#allocation10], %s115
      %s118 = sshll.u32 [#allocation9], 4
      %s119 = int_to_ptr.vmem [resolvable:$true] %s118
      %121 = dma.hbm_to_vmem [thread:$0]  %s19, 16, %s119, [#allocation10]
    $region41: #{tpu_custom_call.1} parent=1 // pred_fallthru
      _
    // Predicated region
    $region42: #{tpu_custom_call.1} parent=1 // pred_check
      _
    $region43: #{tpu_custom_call.1} parent=1 // pred_check_branch
      %123 = sbr.rel (0) target = $region45
    $region44: #{tpu_custom_call.1} parent=1 // pred_region
      _
    $region45: #{tpu_custom_call.1} parent=1 // pred_fallthru
      _
    // Predicated region
    $region46: #{tpu_custom_call.1} parent=1 // pred_check
      _
    $region47: #{tpu_custom_call.1} parent=1 // pred_check_branch
      %125 = sbr.rel (0) target = $region49
    $region48: #{tpu_custom_call.1} parent=1 // pred_region
      _
    $region49: #{tpu_custom_call.1} parent=1 // pred_fallthru
      _
    // Predicated region
    $region50: #{tpu_custom_call.1} parent=1 // pred_check
      _
    $region51: #{tpu_custom_call.1} parent=1 // pred_check_branch
      %127 = sbr.rel (0) target = $region53
    $region52: #{tpu_custom_call.1} parent=1 // pred_region
      _
    $region53: #{tpu_custom_call.1} parent=1 // pred_fallthru
      _
    // Predicated region
    $region54: #{tpu_custom_call.1} parent=1 // pred_check
      _
    $region55: #{tpu_custom_call.1} parent=1 // pred_check_branch
      %129 = sbr.rel (0) target = $region57
    $region56: #{tpu_custom_call.1} parent=1 // pred_region
      _
    $region57: #{tpu_custom_call.1} parent=1 // pred_fallthru
      _
    // Predicated region
    $region58: #{tpu_custom_call.1} parent=1 // pred_check
      _
    $region59: #{tpu_custom_call.1} parent=1 // pred_check_branch
      %131 = sbr.rel (0) target = $region61
    $region60: #{tpu_custom_call.1} parent=1 // pred_region
      _
    $region61: #{tpu_custom_call.1} parent=1 // pred_fallthru
      _
    // Predicated region
    $region62: #{tpu_custom_call.1} parent=1 // pred_check
      _
    $region63: #{tpu_custom_call.1} parent=1 // pred_check_branch
      %133 = sbr.rel (0) target = $region65
    $region64: #{tpu_custom_call.1} parent=1 // pred_region
      _
    $region65: #{tpu_custom_call.1} parent=1 // pred_fallthru
      _
    // Predicated region
    $region66: #{tpu_custom_call.1} parent=1 // pred_check
      _
    $region67: #{tpu_custom_call.1} parent=1 // pred_check_branch
      %135 = sbr.rel (0) target = $region69
    $region68: #{tpu_custom_call.1} parent=1 // pred_region
      _
    $region69: #{tpu_custom_call.1} parent=1 // pred_fallthru
      _
    // Predicated region
    $region70: #{tpu_custom_call.1} parent=1 // pred_check
      _
    $region71: #{tpu_custom_call.1} parent=1 // pred_check_branch
      %137 = sbr.rel (0) target = $region73
    $region72: #{tpu_custom_call.1} parent=1 // pred_region
      _
    $region73: #{tpu_custom_call.1} parent=1 // pred_fallthru
      _
    // Predicated region
    $region74: #{tpu_custom_call.1} parent=1 // pred_check
      _
    $region75: #{tpu_custom_call.1} parent=1 // pred_check_branch
      %139 = sbr.rel (0) target = $region77
    $region76: #{tpu_custom_call.1} parent=1 // pred_region
      _
    $region77: #{tpu_custom_call.1} parent=1 // pred_fallthru
      _
    // Predicated region
    $region78: #{tpu_custom_call.1} parent=1 // pred_check
      _
    $region79: #{tpu_custom_call.1} parent=1 // pred_check_branch
      %141 = sbr.rel (0) target = $region81
    $region80: #{tpu_custom_call.1} parent=1 // pred_region
      _
    $region81: #{tpu_custom_call.1} parent=1 // pred_fallthru
      _
    // Predicated region
    $region82: #{tpu_custom_call.1} parent=1 // pred_check
      _
    $region83: #{tpu_custom_call.1} parent=1 // pred_check_branch
      %143 = sbr.rel (0) target = $region85
    $region84: #{tpu_custom_call.1} parent=1 // pred_region
      _
    $region85: #{tpu_custom_call.1} parent=1 // pred_fallthru
      _
    // Predicated region
    $region86: #{tpu_custom_call.1} parent=1 // pred_check
      _
    $region87: #{tpu_custom_call.1} parent=1 // pred_check_branch
      %145 = sbr.rel (0) target = $region89
    $region88: #{tpu_custom_call.1} parent=1 // pred_region
      _
    $region89: #{tpu_custom_call.1} parent=1 // pred_fallthru
      _
    // Predicated region
    $region90: #{tpu_custom_call.1} parent=1 // pred_check
      _
    $region91: #{tpu_custom_call.1} parent=1 // pred_check_branch
      %147 = sbr.rel (0) target = $region93
    $region92: #{tpu_custom_call.1} parent=1 // pred_region
      _
    $region93: #{tpu_custom_call.1} parent=1 // pred_fallthru
      _
    // Predicated region
    $region94: #{tpu_custom_call.1} parent=1 // pred_check
      _
    $region95: #{tpu_custom_call.1} parent=1 // pred_check_branch
      %149 = sbr.rel (0) target = $region97
    $region96: #{tpu_custom_call.1} parent=1 // pred_region
      _
    $region97: #{tpu_custom_call.1} parent=1 // pred_fallthru
      _
    // Predicated region
    $region98: #{tpu_custom_call.1} parent=1 // pred_check
      _
    $region99: #{tpu_custom_call.1} parent=1 // pred_check_branch
      %151 = sbr.rel (0) target = $region101
    $region100: #{tpu_custom_call.1} parent=1 // pred_region
      _
    $region101: #{tpu_custom_call.1} parent=1 // pred_fallthru
      _
    // Predicated region
    $region102: #{tpu_custom_call.1} parent=1 // pred_check
      _
    $region103: #{tpu_custom_call.1} parent=1 // pred_check_branch
      %153 = sbr.rel (0) target = $region105
    $region104: #{tpu_custom_call.1} parent=1 // pred_region
      _
    $region105: #{tpu_custom_call.1} parent=1 // pred_fallthru
      _
    // Predicated region
    $region106: #{tpu_custom_call.1} parent=1 // pred_check
      _
    $region107: #{tpu_custom_call.1} parent=1 // pred_check_branch
      %155 = sbr.rel (0) target = $region109
    $region108: #{tpu_custom_call.1} parent=1 // pred_region
      _
    $region109: #{tpu_custom_call.1} parent=1 // pred_fallthru
      _
    // Predicated region
    $region110: #{tpu_custom_call.1} parent=1 // pred_check
      _
    $region111: #{tpu_custom_call.1} parent=1 // pred_check_branch
      %157 = sbr.rel (0) target = $region113
    $region112: #{tpu_custom_call.1} parent=1 // pred_region
      _
    $region113: #{tpu_custom_call.1} parent=1 // pred_fallthru
      _
    // Predicated region
    $region114: #{tpu_custom_call.1} parent=1 // pred_check
      _
    $region115: #{tpu_custom_call.1} parent=1 // pred_check_branch
      %159 = sbr.rel (0) target = $region117
    $region116: #{tpu_custom_call.1} parent=1 // pred_region
      _
    $region117: #{tpu_custom_call.1} parent=1 // pred_fallthru
      _
    // Predicated region
    $region118: #{tpu_custom_call.1} parent=1 // pred_check
      _
    $region119: #{tpu_custom_call.1} parent=1 // pred_check_branch
      %161 = sbr.rel (0) target = $region121
    $region120: #{tpu_custom_call.1} parent=1 // pred_region
      %162 = dma.done [#allocation4], 128
    $region121: #{tpu_custom_call.1} parent=1 // pred_fallthru
      _
    // Predicated region
    $region122: #{tpu_custom_call.1} parent=1 // pred_check
      _
    $region123: #{tpu_custom_call.1} parent=1 // pred_check_branch
      %164 = sbr.rel (0) target = $region125
    $region124: #{tpu_custom_call.1} parent=1 // pred_region
      %165 = dma.done [#allocation7], 16
    $region125: #{tpu_custom_call.1} parent=1 // pred_fallthru
      _
    // Predicated region
    $region126: #{tpu_custom_call.1} parent=1 // pred_check
      _
    $region127: #{tpu_custom_call.1} parent=1 // pred_check_branch
      %167 = sbr.rel (0) target = $region129
    $region128: #{tpu_custom_call.1} parent=1 // pred_region
      %168 = dma.done [#allocation7], 16
    $region129: #{tpu_custom_call.1} parent=1 // pred_fallthru
      _
    // Predicated region
    $region130: #{tpu_custom_call.1} parent=1 // pred_check
      _
    $region131: #{tpu_custom_call.1} parent=1 // pred_check_branch
      %170 = sbr.rel (0) target = $region133
    $region132: #{tpu_custom_call.1} parent=1 // pred_region
      %171 = dma.done [#allocation10], 16
    $region133: #{tpu_custom_call.1} parent=1 // pred_fallthru
      _
    %v173 = vld [vmem:[%s1] sm:$0xff]
    %v174 = vld [vmem:[%s1 + $0x8] sm:$0xff]
    %v175 = vld [vmem:[%s3] sm:$0xff]
    %v176 = vld [vmem:[%s3 + $0x8] sm:$0xff]
    %v177 = vld [vmem:[#allocation3] sm:$0x3f]
    %vm178 = vcmp.gt.f32.partialorder %v175, 0.0
    %vm179 = vcmp.gt.f32.partialorder %v176, 0.0
    %vm180 = vcmask 48128
    %v181 = vsel %vm180, %v175, 0.0
    %182 = vadd.xlane.f32.xlu0 %v181
    %v183 = vpop.xlane.xlu0 %182
    %v184 = vsel %vm180, %v176, 0.0
    %185 = vadd.xlane.f32.xlu0 %v184
    %v186 = vpop.xlane.xlu0 %185
    %v187 = vadd.f32 %v181, %v184
    %v188 = vrot.slane %v187, 4
    %v189 = vadd.f32 %v187, %v188
    %v190 = vrot.slane %v189, 2
    %v191 = vadd.f32 %v189, %v190
    %v192 = vrot.slane %v191, 1
    %v193 = vadd.f32 %v191, %v192
    %vm194 = vcmp.gt.f32.partialorder %v183, 0.0
    %vm195 = vcmp.gt.f32.partialorder %v186, 0.0
    %v196 = vmax.f32 %v183, 1.0
    %v197 = vmax.f32 %v186, 1.0
    %v198 = vrcp.pop %v196
    %v199 = vrcp.pop %v197
    %v200 = vsel %vm194, %v198, 0.0
    %v201 = vsel %vm195, %v199, 0.0
    %vm202 = vcmp.gt.f32.partialorder %v193, 0.0
    %v203 = vmax.f32 %v193, 1.0
    %v204 = vrcp.pop %v203
    %v205 = vsel %vm202, %v204, 0.0
    %v206 = vld [vmem:[%s43] sm:$0xff]
    %v207 = vld [vmem:[%s43 + $0x8] sm:$0xff]
    %v208 = vld [vmem:[%s45] sm:$0xff]
    %v209 = vld [vmem:[%s45 + $0x8] sm:$0xff]
    %v210 = vld [vmem:[%s47] sm:$0xff]
    %v211 = vld [vmem:[%s47 + $0x8] sm:$0xff]
    %v212 = vld [vmem:[#allocation2] sm:$0x1]
    %v213 = vpack.c.bf16 %v207, %v206
    %v214 = vpack.c.bf16 %v174, %v173
    %216 = vset.pattern.permute.xlu0 0
    %217 = vperm.xlu0 %216, %v208
    %v218 = vpop.permute.xlu0 %217
    %221 = vset.pattern.permute.xlu0 0
    %222 = vperm.xlu0 %221, %v209
    %v223 = vpop.permute.xlu0 %222
    %vm225 = vcmask 130048
    %v227 = vsel %vm225, %v213, 0
    %229 = vmatprep.subr.bf16.mxu0 0
    %230 = vmatpush1.bf16.msra.mxu0 %v214
    %231 = vmatprep.subr.bf16.mxu0 0
    %232 = vmatpush1.bf16.msra.mxu0 0
    %233 = vmatprep.subr.bf16.mxu0 0
    %234 = vmatpush1.bf16.msra.mxu0 0
    %235 = vmatprep.subr.bf16.mxu0 0
    %236 = vmatpush1.bf16.msra.mxu0 0
    %237 = vmatprep.subr.bf16.mxu0 0
    %238 = vmatpush1.bf16.msra.mxu0 0
    %239 = vmatprep.subr.bf16.mxu0 0
    %240 = vmatpush1.bf16.msra.mxu0 0
    %241 = vmatprep.subr.bf16.mxu0 0
    %242 = vmatpush1.bf16.msra.mxu0 0
    %243 = vmatprep.subr.bf16.mxu0 0
    %244 = vmatpush1.bf16.msra.mxu0 0
    %245 = vmatprep.subr.bf16.mxu0 0
    %246 = vmatpush1.bf16.msra.mxu0 0
    %247 = vmatprep.subr.bf16.mxu0 0
    %248 = vmatpush1.bf16.msra.mxu0 0
    %249 = vmatprep.subr.bf16.mxu0 0
    %250 = vmatpush1.bf16.msra.mxu0 0
    %251 = vmatprep.subr.bf16.mxu0 0
    %252 = vmatpush1.bf16.msra.mxu0 0
    %253 = vmatprep.subr.bf16.mxu0 0
    %254 = vmatpush1.bf16.msra.mxu0 0
    %255 = vmatprep.subr.bf16.mxu0 0
    %256 = vmatpush1.bf16.msra.mxu0 0
    %257 = vmatprep.subr.bf16.mxu0 0
    %258 = vmatpush1.bf16.msra.mxu0 0
    %259 = vmatprep.subr.bf16.mxu0 0
    %260 = vmatpush1.bf16.msra.mxu0 0
    %261 = vmatprep.mubr.bf16.mxu0 0
    %262 = vmatmul.mubr.bf16.gmra.mrb[0].mxu0 %v227
    %v263 = vpop.f32.mrb[0].mxu0
    %v264 = vadd.f32 %v218, %v263
    %v265 = vpop.f32.mrb[0].mxu0
    %v266 = vpop.f32.mrb[0].mxu0
    %v267 = vadd.f32 %v223, %v266
    %v268 = vpop.f32.mrb[0].mxu0
    %269 = vdwg.mxu0
    %v270 = vmax.f32 %v264, 0.0
    %v271 = vmax.f32 %v267, 0.0
    %273 = vset.pattern.permute.xlu0 0
    %274 = vperm.xlu0 %273, %v210
    %v275 = vpop.permute.xlu0 %274
    %278 = vset.pattern.permute.xlu0 0
    %279 = vperm.xlu0 %278, %v211
    %v280 = vpop.permute.xlu0 %279
    %v282 = vmul.f32 %v275, %v270
    %v283 = vmul.f32 %v280, %v271
    %vm284 = vcmask 261120
    %v285 = vsel %vm284, %v282, 0.0
    %v286 = vsel %vm284, %v283, 0.0
    %v287 = vadd.f32 %v285, %v286
    %v288 = vrot.slane %v287, 4
    %v289 = vadd.f32 %v287, %v288
    %v290 = vrot.slane %v289, 2
    %v291 = vadd.f32 %v289, %v290
    %v292 = vrot.slane %v291, 1
    %v293 = vadd.f32 %v291, %v292
    %295 = vset.pattern.permute.xlu0 0
    %296 = vperm.xlu0 %295, %v212
    %v297 = vpop.permute.xlu0 %296
    %v299 = vlaneseq
    %v300 = vshrl.u32 %v299, 7
    %v301 = vsub.s32 0, %v300
    %v302 = vrot.slane %v297, %v301
    %v303 = vadd.f32 %v293, %v302
    %v304 = vand.u32 2147483647, %v303
    %v305 = vsub.f32 0.0, %v304
    %v306 = vmul.f32 %v305, 1.442695
    %v307 = vpow.pop %v306
    %vm308 = vcmp.ge.f32.partialorder %v303, 0.0
    %v309 = vsel %vm308, 1.0, %v307
    %v310 = vadd.f32 %v307, 1.0
    %v311 = vrcp.pop %v310
    %v312 = vmul.f32 %v309, %v311
    %v313 = vld [vmem:[%s7] sm:$0xff]
    %v314 = vld [vmem:[%s7 + $0x8] sm:$0xff]
    %v315 = vld [vmem:[%s7 + $0x10] sm:$0xff]
    %v316 = vld [vmem:[%s7 + $0x18] sm:$0xff]
    %v317 = vld [vmem:[#allocation6] sm:$0x1]
    %v318 = vld [vmem:[#allocation8] sm:$0x1]
    %v319 = vld [vmem:[%s13] sm:$0x1]
    %v320 = vpack.c.bf16 %v314, %v313
    %v321 = vpack.c.bf16 %v316, %v315
    %v323 = vsel %vm284, %v214, 0
    %325 = vmatprep.subr.bf16.mxu0 0
    %326 = vmatpush1.bf16.msra.mxu0 %v320
    %327 = vmatprep.subr.bf16.mxu0 0
    %328 = vmatpush1.bf16.msra.mxu0 %v321
    %329 = vmatprep.subr.bf16.mxu0 0
    %330 = vmatpush1.bf16.msra.mxu0 0
    %331 = vmatprep.subr.bf16.mxu0 0
    %332 = vmatpush1.bf16.msra.mxu0 0
    %333 = vmatprep.subr.bf16.mxu0 0
    %334 = vmatpush1.bf16.msra.mxu0 0
    %335 = vmatprep.subr.bf16.mxu0 0
    %336 = vmatpush1.bf16.msra.mxu0 0
    %337 = vmatprep.subr.bf16.mxu0 0
    %338 = vmatpush1.bf16.msra.mxu0 0
    %339 = vmatprep.subr.bf16.mxu0 0
    %340 = vmatpush1.bf16.msra.mxu0 0
    %341 = vmatprep.subr.bf16.mxu0 0
    %342 = vmatpush1.bf16.msra.mxu0 0
    %343 = vmatprep.subr.bf16.mxu0 0
    %344 = vmatpush1.bf16.msra.mxu0 0
    %345 = vmatprep.subr.bf16.mxu0 0
    %346 = vmatpush1.bf16.msra.mxu0 0
    %347 = vmatprep.subr.bf16.mxu0 0
    %348 = vmatpush1.bf16.msra.mxu0 0
    %349 = vmatprep.subr.bf16.mxu0 0
    %350 = vmatpush1.bf16.msra.mxu0 0
    %351 = vmatprep.subr.bf16.mxu0 0
    %352 = vmatpush1.bf16.msra.mxu0 0
    %353 = vmatprep.subr.bf16.mxu0 0
    %354 = vmatpush1.bf16.msra.mxu0 0
    %355 = vmatprep.subr.bf16.mxu0 0
    %356 = vmatpush1.bf16.msra.mxu0 0
    %357 = vmatprep.mubr.bf16.mxu0 0
    %358 = vmatmul.mubr.bf16.gmra.mrb[0].mxu0 %v323
    %v359 = vpop.f32.mrb[0].mxu0
    %v360 = vadd.f32 0.0, %v359
    %v361 = vpop.f32.mrb[0].mxu0
    %v362 = vpop.f32.mrb[0].mxu0
    %v363 = vadd.f32 0.0, %v362
    %v364 = vpop.f32.mrb[0].mxu0
    %365 = vdwg.mxu0
    %v366 = vpack.c.bf16 %v177, %v177
    %v368 = vsel %vm284, %v366, 0
    %370 = vmatprep.subr.bf16.mxu0 0
    %371 = vmatpush1.bf16.msra.mxu0 %v320
    %372 = vmatprep.subr.bf16.mxu0 0
    %373 = vmatpush1.bf16.msra.mxu0 %v321
    %374 = vmatprep.subr.bf16.mxu0 0
    %375 = vmatpush1.bf16.msra.mxu0 0
    %376 = vmatprep.subr.bf16.mxu0 0
    %377 = vmatpush1.bf16.msra.mxu0 0
    %378 = vmatprep.subr.bf16.mxu0 0
    %379 = vmatpush1.bf16.msra.mxu0 0
    %380 = vmatprep.subr.bf16.mxu0 0
    %381 = vmatpush1.bf16.msra.mxu0 0
    %382 = vmatprep.subr.bf16.mxu0 0
    %383 = vmatpush1.bf16.msra.mxu0 0
    %384 = vmatprep.subr.bf16.mxu0 0
    %385 = vmatpush1.bf16.msra.mxu0 0
    %386 = vmatprep.subr.bf16.mxu0 0
    %387 = vmatpush1.bf16.msra.mxu0 0
    %388 = vmatprep.subr.bf16.mxu0 0
    %389 = vmatpush1.bf16.msra.mxu0 0
    %390 = vmatprep.subr.bf16.mxu0 0
    %391 = vmatpush1.bf16.msra.mxu0 0
    %392 = vmatprep.subr.bf16.mxu0 0
    %393 = vmatpush1.bf16.msra.mxu0 0
    %394 = vmatprep.subr.bf16.mxu0 0
    %395 = vmatpush1.bf16.msra.mxu0 0
    %396 = vmatprep.subr.bf16.mxu0 0
    %397 = vmatpush1.bf16.msra.mxu0 0
    %398 = vmatprep.subr.bf16.mxu0 0
    %399 = vmatpush1.bf16.msra.mxu0 0
    %400 = vmatprep.subr.bf16.mxu0 0
    %401 = vmatpush1.bf16.msra.mxu0 0
    %402 = vmatprep.mubr.bf16.mxu0 0
    %403 = vmatmul.mubr.bf16.gmra.mrb[0].mxu0 %v368
    %v404 = vpop.f32.mrb[0].mxu0
    %v405 = vadd.f32 0.0, %v404
    %v406 = vpop.f32.mrb[0].mxu0
    %v407 = vpop.f32.mrb[0].mxu0
    %v408 = vpop.f32.mrb[0].mxu0
    %409 = vdwg.mxu0
    %v411 = vlaneseq
    %v412 = vshrl.u32 %v411, 7
    %v413 = vsub.s32 0, %v412
    %v414 = vrot.slane %v317, %v413
    %v416 = vmul.f32 %v360, %v414
    %v417 = vmul.f32 %v363, %v414
    %v418 = vsel %vm284, %v416, 0.0
    %419 = vadd.xlane.f32.xlu0 %v418
    %v420 = vpop.xlane.xlu0 %419
    %v421 = vsel %vm284, %v417, 0.0
    %422 = vadd.xlane.f32.xlu0 %v421
    %v423 = vpop.xlane.xlu0 %422
    %v424 = vpack.c.bf16 %v318, %v318
    %v425 = vpack.c.bf16 %v405, %v405
    %v427 = vsel %vm284, %v424, 0
    %v430 = vsel %vm284, %v425, 0
    %432 = vmatprep.subr.bf16.mxu0 0
    %433 = vmatpush1.bf16.xpose.msra.mxu0 %v430
    %434 = vmatprep.subr.bf16.mxu0 0
    %435 = vmatpush1.bf16.xpose.msra.mxu0 0
    %436 = vmatprep.subr.bf16.mxu0 0
    %437 = vmatpush1.bf16.xpose.msra.mxu0 0
    %438 = vmatprep.subr.bf16.mxu0 0
    %439 = vmatpush1.bf16.xpose.msra.mxu0 0
    %440 = vmatprep.subr.bf16.mxu0 0
    %441 = vmatpush1.bf16.xpose.msra.mxu0 0
    %442 = vmatprep.subr.bf16.mxu0 0
    %443 = vmatpush1.bf16.xpose.msra.mxu0 0
    %444 = vmatprep.subr.bf16.mxu0 0
    %445 = vmatpush1.bf16.xpose.msra.mxu0 0
    %446 = vmatprep.subr.bf16.mxu0 0
    %447 = vmatpush1.bf16.xpose.msra.mxu0 0
    %448 = vmatprep.subr.bf16.mxu0 0
    %449 = vmatpush1.bf16.xpose.msra.mxu0 0
    %450 = vmatprep.subr.bf16.mxu0 0
    %451 = vmatpush1.bf16.xpose.msra.mxu0 0
    %452 = vmatprep.subr.bf16.mxu0 0
    %453 = vmatpush1.bf16.xpose.msra.mxu0 0
    %454 = vmatprep.subr.bf16.mxu0 0
    %455 = vmatpush1.bf16.xpose.msra.mxu0 0
    %456 = vmatprep.subr.bf16.mxu0 0
    %457 = vmatpush1.bf16.xpose.msra.mxu0 0
    %458 = vmatprep.subr.bf16.mxu0 0
    %459 = vmatpush1.bf16.xpose.msra.mxu0 0
    %460 = vmatprep.subr.bf16.mxu0 0
    %461 = vmatpush1.bf16.xpose.msra.mxu0 0
    %462 = vmatprep.subr.bf16.mxu0 0
    %463 = vmatpush1.bf16.xpose.msra.mxu0 0
    %464 = vmatprep.mubr.bf16.mxu0 0
    %465 = vmatmul.mubr.bf16.gmra.mrb[0].mxu0 %v427
    %v466 = vpop.f32.mrb[0].mxu0
    %v467 = vadd.f32 0.0, %v466
    %v468 = vpop.f32.mrb[0].mxu0
    %v469 = vpop.f32.mrb[0].mxu0
    %v470 = vpop.f32.mrb[0].mxu0
    %471 = vdwg.mxu0
    %v472 = vlaneseq
    %v473 = vshrl.u32 %v472, 7
    %v474 = vsub.s32 0, %v473
    %v475 = vrot.slane %v467, %v474
    %v476 = vadd.f32 %v420, %v475
    %v477 = vadd.f32 %v423, %v475
    %vm478 = vcmp.gt.f32.partialorder %v476, 0.0
    %vm479 = vcmp.gt.f32.partialorder %v477, 0.0
    %v480 = vmul.f32 %v476, 0.2
    %v481 = vmul.f32 %v477, 0.2
    %v482 = vsel %vm478, %v476, %v480
    %v483 = vsel %vm479, %v477, %v481
    %v484 = vsel %vm178, %v482, -1e+30
    %v485 = vsel %vm179, %v483, -1e+30
    %v486 = vsel %vm180, %v484, -inf
    %v487 = vsel %vm180, %v485, -inf
    %v488 = vmax.f32 %v486, %v487
    %v489 = vrot.slane %v488, 4
    %v490 = vmax.f32 %v488, %v489
    %v491 = vrot.slane %v490, 2
    %v492 = vmax.f32 %v490, %v491
    %v493 = vrot.slane %v492, 1
    %v494 = vmax.f32 %v492, %v493
    %v495 = vsel %vm178, %v482, %v494
    %v496 = vsel %vm179, %v483, %v494
    %v497 = vsub.f32 %v495, %v494
    %v498 = vsub.f32 %v496, %v494
    %v499 = vmul.f32 %v497, 1.442695
    %v500 = vpow.pop %v499
    %v501 = vmul.f32 %v498, 1.442695
    %v502 = vpow.pop %v501
    %v503 = vsel %vm178, %v500, 0.0
    %v504 = vsel %vm179, %v502, 0.0
    %v505 = vsel %vm180, %v503, 0.0
    %v506 = vsel %vm180, %v504, 0.0
    %v507 = vadd.f32 %v505, %v506
    %v508 = vrot.slane %v507, 4
    %v509 = vadd.f32 %v507, %v508
    %v510 = vrot.slane %v509, 2
    %v511 = vadd.f32 %v509, %v510
    %v512 = vrot.slane %v511, 1
    %v513 = vadd.f32 %v511, %v512
    %v514 = vadd.f32 %v513, 1e-16
    %v515 = vrcp.pop %v514
    %v516 = vmul.f32 %v503, %v515
    %v517 = vmul.f32 %v504, %v515
    %v518 = vmul.f32 %v516, %v205
    %v519 = vmul.f32 %v517, %v205
    %v520 = vpack.c.bf16 %v519, %v518
    %v521 = vpack.c.bf16 %v517, %v516
    %v523 = vsel %vm180, %v520, 0
    %v526 = vsel %vm180, %v521, 0
    %528 = vmatprep.subr.bf16.mxu0 0
    %529 = vmatpush1.bf16.xpose.msra.mxu0 %v526
    %530 = vmatprep.subr.bf16.mxu0 0
    %531 = vmatpush1.bf16.xpose.msra.mxu0 0
    %532 = vmatprep.subr.bf16.mxu0 0
    %533 = vmatpush1.bf16.xpose.msra.mxu0 0
    %534 = vmatprep.subr.bf16.mxu0 0
    %535 = vmatpush1.bf16.xpose.msra.mxu0 0
    %536 = vmatprep.subr.bf16.mxu0 0
    %537 = vmatpush1.bf16.xpose.msra.mxu0 0
    %538 = vmatprep.subr.bf16.mxu0 0
    %539 = vmatpush1.bf16.xpose.msra.mxu0 0
    %540 = vmatprep.subr.bf16.mxu0 0
    %541 = vmatpush1.bf16.xpose.msra.mxu0 0
    %542 = vmatprep.subr.bf16.mxu0 0
    %543 = vmatpush1.bf16.xpose.msra.mxu0 0
    %544 = vmatprep.subr.bf16.mxu0 0
    %545 = vmatpush1.bf16.xpose.msra.mxu0 0
    %546 = vmatprep.subr.bf16.mxu0 0
    %547 = vmatpush1.bf16.xpose.msra.mxu0 0
    %548 = vmatprep.subr.bf16.mxu0 0
    %549 = vmatpush1.bf16.xpose.msra.mxu0 0
    %550 = vmatprep.subr.bf16.mxu0 0
    %551 = vmatpush1.bf16.xpose.msra.mxu0 0
    %552 = vmatprep.subr.bf16.mxu0 0
    %553 = vmatpush1.bf16.xpose.msra.mxu0 0
    %554 = vmatprep.subr.bf16.mxu0 0
    %555 = vmatpush1.bf16.xpose.msra.mxu0 0
    %556 = vmatprep.subr.bf16.mxu0 0
    %557 = vmatpush1.bf16.xpose.msra.mxu0 0
    %558 = vmatprep.subr.bf16.mxu0 0
    %559 = vmatpush1.bf16.xpose.msra.mxu0 0
    %560 = vmatprep.mubr.bf16.mxu0 0
    %561 = vmatmul.mubr.bf16.gmra.mrb[0].mxu0 %v523
    %v562 = vpop.f32.mrb[0].mxu0
    %v563 = vadd.f32 0.0, %v562
    %v564 = vpop.f32.mrb[0].mxu0
    %v565 = vpop.f32.mrb[0].mxu0
    %v566 = vadd.f32 0.0, %v565
    %v567 = vpop.f32.mrb[0].mxu0
    %568 = vdwg.mxu0
    %v569 = vpack.c.bf16 %v566, %v563
    %v570 = vpack.c.bf16 %v363, %v360
    %v572 = vsel %vm225, %v569, 0
    %574 = vmatprep.subr.bf16.mxu0 0
    %575 = vmatpush1.bf16.msra.mxu0 %v570
    %576 = vmatprep.subr.bf16.mxu0 0
    %577 = vmatpush1.bf16.msra.mxu0 0
    %578 = vmatprep.subr.bf16.mxu0 0
    %579 = vmatpush1.bf16.msra.mxu0 0
    %580 = vmatprep.subr.bf16.mxu0 0
    %581 = vmatpush1.bf16.msra.mxu0 0
    %582 = vmatprep.subr.bf16.mxu0 0
    %583 = vmatpush1.bf16.msra.mxu0 0
    %584 = vmatprep.subr.bf16.mxu0 0
    %585 = vmatpush1.bf16.msra.mxu0 0
    %586 = vmatprep.subr.bf16.mxu0 0
    %587 = vmatpush1.bf16.msra.mxu0 0
    %588 = vmatprep.subr.bf16.mxu0 0
    %589 = vmatpush1.bf16.msra.mxu0 0
    %590 = vmatprep.subr.bf16.mxu0 0
    %591 = vmatpush1.bf16.msra.mxu0 0
    %592 = vmatprep.subr.bf16.mxu0 0
    %593 = vmatpush1.bf16.msra.mxu0 0
    %594 = vmatprep.subr.bf16.mxu0 0
    %595 = vmatpush1.bf16.msra.mxu0 0
    %596 = vmatprep.subr.bf16.mxu0 0
    %597 = vmatpush1.bf16.msra.mxu0 0
    %598 = vmatprep.subr.bf16.mxu0 0
    %599 = vmatpush1.bf16.msra.mxu0 0
    %600 = vmatprep.subr.bf16.mxu0 0
    %601 = vmatpush1.bf16.msra.mxu0 0
    %602 = vmatprep.subr.bf16.mxu0 0
    %603 = vmatpush1.bf16.msra.mxu0 0
    %604 = vmatprep.subr.bf16.mxu0 0
    %605 = vmatpush1.bf16.msra.mxu0 0
    %606 = vmatprep.mubr.bf16.mxu0 0
    %607 = vmatmul.mubr.bf16.gmra.mrb[0].mxu0 %v572
    %v608 = vpop.f32.mrb[0].mxu0
    %v609 = vadd.f32 0.0, %v608
    %v610 = vpop.f32.mrb[0].mxu0
    %v611 = vpop.f32.mrb[0].mxu0
    %v612 = vadd.f32 0.0, %v611
    %v613 = vpop.f32.mrb[0].mxu0
    %614 = vdwg.mxu0
    %v615 = vmul.f32 %v200, %v609
    %v616 = vmul.f32 %v201, %v612
    %v618 = vlaneseq
    %v619 = vshrl.u32 %v618, 7
    %v620 = vsub.s32 0, %v619
    %v621 = vrot.slane %v319, %v620
    %v623 = vadd.f32 %v615, %v621
    %v624 = vadd.f32 %v616, %v621
    %v625 = vld [vmem:[%s15] sm:$0x1]
    %v626 = vld [vmem:[%s17] sm:$0x1]
    %v627 = vld [vmem:[#allocation9] sm:$0x1]
    %v628 = vsel %vm284, %v623, 0.0
    %v629 = vsel %vm284, %v624, 0.0
    %v630 = vadd.f32 %v628, %v629
    %v631 = vrot.slane %v630, 4
    %v632 = vadd.f32 %v630, %v631
    %v633 = vrot.slane %v632, 2
    %v634 = vadd.f32 %v632, %v633
    %v635 = vrot.slane %v634, 1
    %v636 = vadd.f32 %v634, %v635
    %v637 = vrcp.pop 16.0
    %v638 = vmul.f32 %v636, %v637
    %v639 = vmul.f32 %v638, %v627
    %v640 = vlaneseq
    %v641 = vshrl.u32 %v640, 7
    %v642 = vsub.s32 0, %v641
    %v643 = vrot.slane %v639, %v642
    %v644 = vsub.f32 %v623, %v643
    %v645 = vsub.f32 %v624, %v643
    %v646 = vmul.f32 %v644, %v644
    %v647 = vmul.f32 %v645, %v645
    %v648 = vsel %vm284, %v646, 0.0
    %v649 = vsel %vm284, %v647, 0.0
    %v650 = vadd.f32 %v648, %v649
    %v651 = vrot.slane %v650, 4
    %v652 = vadd.f32 %v650, %v651
    %v653 = vrot.slane %v652, 2
    %v654 = vadd.f32 %v652, %v653
    %v655 = vrot.slane %v654, 1
    %v656 = vadd.f32 %v654, %v655
    %v657 = vmul.f32 %v656, %v637
    %v659 = vlaneseq
    %v660 = vshrl.u32 %v659, 7
    %v661 = vsub.s32 0, %v660
    %v662 = vrot.slane %v625, %v661
    %v664 = vmul.f32 %v662, %v644
    %v665 = vmul.f32 %v662, %v645
    %v666 = vadd.f32 %v657, 1e-05
    %v667 = vrsqrt.pop %v666
    %v668 = vmul.f32 %v664, %v667
    %v669 = vmul.f32 %v665, %v667
    %v671 = vlaneseq
    %v672 = vshrl.u32 %v671, 7
    %v673 = vsub.s32 0, %v672
    %v674 = vrot.slane %v626, %v673
    %v676 = vadd.f32 %v668, %v674
    %v677 = vadd.f32 %v669, %v674
    %vm678 = vcmp.gt.f32.partialorder %v676, 0.0
    %vm679 = vcmp.gt.f32.partialorder %v677, 0.0
    %v680 = vmul.f32 %v676, 0.01
    %v681 = vmul.f32 %v677, 0.01
    %v682 = vsel %vm678, %v676, %v680
    %v683 = vsel %vm679, %v677, %v681
    %v684 = vld [vmem:[%s21] sm:$0xff]
    %v685 = vld [vmem:[%s21 + $0x8] sm:$0xff]
    %v686 = vld [vmem:[%s21 + $0x10] sm:$0xff]
    %v687 = vld [vmem:[%s21 + $0x18] sm:$0xff]
    %v688 = vpack.c.bf16 %v683, %v682
    %v689 = vpack.c.bf16 %v685, %v684
    %v690 = vpack.c.bf16 %v687, %v686
    %v691 = vld [vmem:[%s23] sm:$0x1]
    %v693 = vlaneseq
    %v694 = vshrl.u32 %v693, 7
    %v695 = vsub.s32 0, %v694
    %v696 = vrot.slane %v691, %v695
    %v699 = vsel %vm284, %v688, 0
    %701 = vmatprep.subr.bf16.mxu0 0
    %702 = vmatpush1.bf16.msra.mxu0 %v689
    %703 = vmatprep.subr.bf16.mxu0 0
    %704 = vmatpush1.bf16.msra.mxu0 %v690
    %705 = vmatprep.subr.bf16.mxu0 0
    %706 = vmatpush1.bf16.msra.mxu0 0
    %707 = vmatprep.subr.bf16.mxu0 0
    %708 = vmatpush1.bf16.msra.mxu0 0
    %709 = vmatprep.subr.bf16.mxu0 0
    %710 = vmatpush1.bf16.msra.mxu0 0
    %711 = vmatprep.subr.bf16.mxu0 0
    %712 = vmatpush1.bf16.msra.mxu0 0
    %713 = vmatprep.subr.bf16.mxu0 0
    %714 = vmatpush1.bf16.msra.mxu0 0
    %715 = vmatprep.subr.bf16.mxu0 0
    %716 = vmatpush1.bf16.msra.mxu0 0
    %717 = vmatprep.subr.bf16.mxu0 0
    %718 = vmatpush1.bf16.msra.mxu0 0
    %719 = vmatprep.subr.bf16.mxu0 0
    %720 = vmatpush1.bf16.msra.mxu0 0
    %721 = vmatprep.subr.bf16.mxu0 0
    %722 = vmatpush1.bf16.msra.mxu0 0
    %723 = vmatprep.subr.bf16.mxu0 0
    %724 = vmatpush1.bf16.msra.mxu0 0
    %725 = vmatprep.subr.bf16.mxu0 0
    %726 = vmatpush1.bf16.msra.mxu0 0
    %727 = vmatprep.subr.bf16.mxu0 0
    %728 = vmatpush1.bf16.msra.mxu0 0
    %729 = vmatprep.subr.bf16.mxu0 0
    %730 = vmatpush1.bf16.msra.mxu0 0
    %731 = vmatprep.subr.bf16.mxu0 0
    %732 = vmatpush1.bf16.msra.mxu0 0
    %733 = vmatprep.mubr.bf16.mxu0 0
    %734 = vmatmul.mubr.bf16.gmra.mrb[0].mxu0 %v699
    %v735 = vpop.f32.mrb[0].mxu0
    %v736 = vadd.f32 %v696, %v735
    %v737 = vpop.f32.mrb[0].mxu0
    %v738 = vpop.f32.mrb[0].mxu0
    %v739 = vadd.f32 %v696, %v738
    %v740 = vpop.f32.mrb[0].mxu0
    %741 = vdwg.mxu0
    %vm742 = vcmp.gt.f32.partialorder %v736, 0.0
    %vm743 = vcmp.gt.f32.partialorder %v739, 0.0
    %v744 = vmul.f32 %v736, 0.01
    %v745 = vmul.f32 %v739, 0.01
    %v746 = vsel %vm742, %v736, %v744
    %v747 = vsel %vm743, %v739, %v745
    %v748 = vpack.c.bf16 %v747, %v746
    %749 = vmatprep.subr.bf16.mxu0 0
    %750 = vmatpush1.bf16.msra.mxu0 %v748
    %751 = vmatprep.subr.bf16.mxu0 0
    %752 = vmatpush1.bf16.msra.mxu0 0
    %753 = vmatprep.subr.bf16.mxu0 0
    %754 = vmatpush1.bf16.msra.mxu0 0
    %755 = vmatprep.subr.bf16.mxu0 0
    %756 = vmatpush1.bf16.msra.mxu0 0
    %757 = vmatprep.subr.bf16.mxu0 0
    %758 = vmatpush1.bf16.msra.mxu0 0
    %759 = vmatprep.subr.bf16.mxu0 0
    %760 = vmatpush1.bf16.msra.mxu0 0
    %761 = vmatprep.subr.bf16.mxu0 0
    %762 = vmatpush1.bf16.msra.mxu0 0
    %763 = vmatprep.subr.bf16.mxu0 0
    %764 = vmatpush1.bf16.msra.mxu0 0
    %765 = vmatprep.subr.bf16.mxu0 0
    %766 = vmatpush1.bf16.msra.mxu0 0
    %767 = vmatprep.subr.bf16.mxu0 0
    %768 = vmatpush1.bf16.msra.mxu0 0
    %769 = vmatprep.subr.bf16.mxu0 0
    %770 = vmatpush1.bf16.msra.mxu0 0
    %771 = vmatprep.subr.bf16.mxu0 0
    %772 = vmatpush1.bf16.msra.mxu0 0
    %773 = vmatprep.subr.bf16.mxu0 0
    %774 = vmatpush1.bf16.msra.mxu0 0
    %775 = vmatprep.subr.bf16.mxu0 0
    %776 = vmatpush1.bf16.msra.mxu0 0
    %777 = vmatprep.subr.bf16.mxu0 0
    %778 = vmatpush1.bf16.msra.mxu0 0
    %779 = vmatprep.subr.bf16.mxu0 0
    %780 = vmatpush1.bf16.msra.mxu0 0
    %781 = vmatprep.mubr.bf16.mxu0 0
    %782 = vmatmul.mubr.bf16.gmra.mrb[0].mxu0 %v227
    %v783 = vpop.f32.mrb[0].mxu0
    %v784 = vadd.f32 %v218, %v783
    %v785 = vpop.f32.mrb[0].mxu0
    %v786 = vpop.f32.mrb[0].mxu0
    %v787 = vadd.f32 %v223, %v786
    %v788 = vpop.f32.mrb[0].mxu0
    %789 = vdwg.mxu0
    %v790 = vmax.f32 %v784, 0.0
    %v791 = vmax.f32 %v787, 0.0
    %v792 = vmul.f32 %v275, %v790
    %v793 = vmul.f32 %v280, %v791
    %v794 = vsel %vm225, %v792, 0.0
    %v795 = vsel %vm225, %v793, 0.0
    %v796 = vadd.f32 %v794, %v795
    %v797 = vrot.slane %v796, 4
    %v798 = vadd.f32 %v796, %v797
    %v799 = vrot.slane %v798, 2
    %v800 = vadd.f32 %v798, %v799
    %v801 = vrot.slane %v800, 1
    %v802 = vadd.f32 %v800, %v801
    %v803 = vadd.f32 %v802, %v302
    %v804 = vand.u32 2147483647, %v803
    %v805 = vsub.f32 0.0, %v804
    %v806 = vmul.f32 %v805, 1.442695
    %v807 = vpow.pop %v806
    %vm808 = vcmp.ge.f32.partialorder %v803, 0.0
    %v809 = vsel %vm808, 1.0, %v807
    %v810 = vadd.f32 %v807, 1.0
    %v811 = vrcp.pop %v810
    %v812 = vmul.f32 %v809, %v811
    %v813 = vld [vmem:[%s25] sm:$0xff]
    %v814 = vld [vmem:[%s25 + $0x8] sm:$0xff]
    %v815 = vld [vmem:[%s25 + $0x10] sm:$0xff]
    %v816 = vld [vmem:[%s25 + $0x18] sm:$0xff]
    %v817 = vld [vmem:[%s27] sm:$0x1]
    %v818 = vld [vmem:[%s29] sm:$0x1]
    %v819 = vld [vmem:[%s31] sm:$0x1]
    %v820 = vpack.c.bf16 %v814, %v813
    %v821 = vpack.c.bf16 %v816, %v815
    %822 = vmatprep.subr.bf16.mxu0 0
    %823 = vmatpush1.bf16.msra.mxu0 %v820
    %824 = vmatprep.subr.bf16.mxu0 0
    %825 = vmatpush1.bf16.msra.mxu0 %v821
    %826 = vmatprep.subr.bf16.mxu0 0
    %827 = vmatpush1.bf16.msra.mxu0 0
    %828 = vmatprep.subr.bf16.mxu0 0
    %829 = vmatpush1.bf16.msra.mxu0 0
    %830 = vmatprep.subr.bf16.mxu0 0
    %831 = vmatpush1.bf16.msra.mxu0 0
    %832 = vmatprep.subr.bf16.mxu0 0
    %833 = vmatpush1.bf16.msra.mxu0 0
    %834 = vmatprep.subr.bf16.mxu0 0
    %835 = vmatpush1.bf16.msra.mxu0 0
    %836 = vmatprep.subr.bf16.mxu0 0
    %837 = vmatpush1.bf16.msra.mxu0 0
    %838 = vmatprep.subr.bf16.mxu0 0
    %839 = vmatpush1.bf16.msra.mxu0 0
    %840 = vmatprep.subr.bf16.mxu0 0
    %841 = vmatpush1.bf16.msra.mxu0 0
    %842 = vmatprep.subr.bf16.mxu0 0
    %843 = vmatpush1.bf16.msra.mxu0 0
    %844 = vmatprep.subr.bf16.mxu0 0
    %845 = vmatpush1.bf16.msra.mxu0 0
    %846 = vmatprep.subr.bf16.mxu0 0
    %847 = vmatpush1.bf16.msra.mxu0 0
    %848 = vmatprep.subr.bf16.mxu0 0
    %849 = vmatpush1.bf16.msra.mxu0 0
    %850 = vmatprep.subr.bf16.mxu0 0
    %851 = vmatpush1.bf16.msra.mxu0 0
    %852 = vmatprep.subr.bf16.mxu0 0
    %853 = vmatpush1.bf16.msra.mxu0 0
    %854 = vmatprep.mubr.bf16.mxu0 0
    %855 = vmatmul.mubr.bf16.gmra.mrb[0].mxu0 %v699
    %v856 = vpop.f32.mrb[0].mxu0
    %v857 = vadd.f32 0.0, %v856
    %v858 = vpop.f32.mrb[0].mxu0
    %v859 = vpop.f32.mrb[0].mxu0
    %v860 = vadd.f32 0.0, %v859
    %v861 = vpop.f32.mrb[0].mxu0
    %862 = vdwg.mxu0
    %863 = vmatprep.subr.bf16.mxu0 0
    %864 = vmatpush1.bf16.msra.mxu0 %v820
    %865 = vmatprep.subr.bf16.mxu0 0
    %866 = vmatpush1.bf16.msra.mxu0 %v821
    %867 = vmatprep.subr.bf16.mxu0 0
    %868 = vmatpush1.bf16.msra.mxu0 0
    %869 = vmatprep.subr.bf16.mxu0 0
    %870 = vmatpush1.bf16.msra.mxu0 0
    %871 = vmatprep.subr.bf16.mxu0 0
    %872 = vmatpush1.bf16.msra.mxu0 0
    %873 = vmatprep.subr.bf16.mxu0 0
    %874 = vmatpush1.bf16.msra.mxu0 0
    %875 = vmatprep.subr.bf16.mxu0 0
    %876 = vmatpush1.bf16.msra.mxu0 0
    %877 = vmatprep.subr.bf16.mxu0 0
    %878 = vmatpush1.bf16.msra.mxu0 0
    %879 = vmatprep.subr.bf16.mxu0 0
    %880 = vmatpush1.bf16.msra.mxu0 0
    %881 = vmatprep.subr.bf16.mxu0 0
    %882 = vmatpush1.bf16.msra.mxu0 0
    %883 = vmatprep.subr.bf16.mxu0 0
    %884 = vmatpush1.bf16.msra.mxu0 0
    %885 = vmatprep.subr.bf16.mxu0 0
    %886 = vmatpush1.bf16.msra.mxu0 0
    %887 = vmatprep.subr.bf16.mxu0 0
    %888 = vmatpush1.bf16.msra.mxu0 0
    %889 = vmatprep.subr.bf16.mxu0 0
    %890 = vmatpush1.bf16.msra.mxu0 0
    %891 = vmatprep.subr.bf16.mxu0 0
    %892 = vmatpush1.bf16.msra.mxu0 0
    %893 = vmatprep.subr.bf16.mxu0 0
    %894 = vmatpush1.bf16.msra.mxu0 0
    %895 = vmatprep.mubr.bf16.mxu0 0
    %896 = vmatmul.mubr.bf16.gmra.mrb[0].mxu0 %v368
    %v897 = vpop.f32.mrb[0].mxu0
    %v898 = vadd.f32 0.0, %v897
    %v899 = vpop.f32.mrb[0].mxu0
    %v900 = vpop.f32.mrb[0].mxu0
    %v901 = vpop.f32.mrb[0].mxu0
    %902 = vdwg.mxu0
    %v904 = vlaneseq
    %v905 = vshrl.u32 %v904, 7
    %v906 = vsub.s32 0, %v905
    %v907 = vrot.slane %v817, %v906
    %v909 = vmul.f32 %v857, %v907
    %v910 = vmul.f32 %v860, %v907
    %v911 = vsel %vm284, %v909, 0.0
    %912 = vadd.xlane.f32.xlu0 %v911
    %v913 = vpop.xlane.xlu0 %912
    %v914 = vsel %vm284, %v910, 0.0
    %915 = vadd.xlane.f32.xlu0 %v914
    %v916 = vpop.xlane.xlu0 %915
    %v917 = vpack.c.bf16 %v818, %v818
    %v918 = vpack.c.bf16 %v898, %v898
    %v920 = vsel %vm284, %v917, 0
    %v923 = vsel %vm284, %v918, 0
    %925 = vmatprep.subr.bf16.mxu0 0
    %926 = vmatpush1.bf16.xpose.msra.mxu0 %v923
    %927 = vmatprep.subr.bf16.mxu0 0
    %928 = vmatpush1.bf16.xpose.msra.mxu0 0
    %929 = vmatprep.subr.bf16.mxu0 0
    %930 = vmatpush1.bf16.xpose.msra.mxu0 0
    %931 = vmatprep.subr.bf16.mxu0 0
    %932 = vmatpush1.bf16.xpose.msra.mxu0 0
    %933 = vmatprep.subr.bf16.mxu0 0
    %934 = vmatpush1.bf16.xpose.msra.mxu0 0
    %935 = vmatprep.subr.bf16.mxu0 0
    %936 = vmatpush1.bf16.xpose.msra.mxu0 0
    %937 = vmatprep.subr.bf16.mxu0 0
    %938 = vmatpush1.bf16.xpose.msra.mxu0 0
    %939 = vmatprep.subr.bf16.mxu0 0
    %940 = vmatpush1.bf16.xpose.msra.mxu0 0
    %941 = vmatprep.subr.bf16.mxu0 0
    %942 = vmatpush1.bf16.xpose.msra.mxu0 0
    %943 = vmatprep.subr.bf16.mxu0 0
    %944 = vmatpush1.bf16.xpose.msra.mxu0 0
    %945 = vmatprep.subr.bf16.mxu0 0
    %946 = vmatpush1.bf16.xpose.msra.mxu0 0
    %947 = vmatprep.subr.bf16.mxu0 0
    %948 = vmatpush1.bf16.xpose.msra.mxu0 0
    %949 = vmatprep.subr.bf16.mxu0 0
    %950 = vmatpush1.bf16.xpose.msra.mxu0 0
    %951 = vmatprep.subr.bf16.mxu0 0
    %952 = vmatpush1.bf16.xpose.msra.mxu0 0
    %953 = vmatprep.subr.bf16.mxu0 0
    %954 = vmatpush1.bf16.xpose.msra.mxu0 0
    %955 = vmatprep.subr.bf16.mxu0 0
    %956 = vmatpush1.bf16.xpose.msra.mxu0 0
    %957 = vmatprep.mubr.bf16.mxu0 0
    %958 = vmatmul.mubr.bf16.gmra.mrb[0].mxu0 %v920
    %v959 = vpop.f32.mrb[0].mxu0
    %v960 = vadd.f32 0.0, %v959
    %v961 = vpop.f32.mrb[0].mxu0
    %v962 = vpop.f32.mrb[0].mxu0
    %v963 = vpop.f32.mrb[0].mxu0
    %964 = vdwg.mxu0
    %v965 = vlaneseq
    %v966 = vshrl.u32 %v965, 7
    %v967 = vsub.s32 0, %v966
    %v968 = vrot.slane %v960, %v967
    %v969 = vadd.f32 %v913, %v968
    %v970 = vadd.f32 %v916, %v968
    %vm971 = vcmp.gt.f32.partialorder %v969, 0.0
    %vm972 = vcmp.gt.f32.partialorder %v970, 0.0
    %v973 = vmul.f32 %v969, 0.2
    %v974 = vmul.f32 %v970, 0.2
    %v975 = vsel %vm971, %v969, %v973
    %v976 = vsel %vm972, %v970, %v974
    %v977 = vsel %vm178, %v975, -1e+30
    %v978 = vsel %vm179, %v976, -1e+30
    %v979 = vsel %vm180, %v977, -inf
    %v980 = vsel %vm180, %v978, -inf
    %v981 = vmax.f32 %v979, %v980
    %v982 = vrot.slane %v981, 4
    %v983 = vmax.f32 %v981, %v982
    %v984 = vrot.slane %v983, 2
    %v985 = vmax.f32 %v983, %v984
    %v986 = vrot.slane %v985, 1
    %v987 = vmax.f32 %v985, %v986
    %v988 = vsel %vm178, %v975, %v987
    %v989 = vsel %vm179, %v976, %v987
    %v990 = vsub.f32 %v988, %v987
    %v991 = vsub.f32 %v989, %v987
    %v992 = vmul.f32 %v990, 1.442695
    %v993 = vpow.pop %v992
    %v994 = vmul.f32 %v991, 1.442695
    %v995 = vpow.pop %v994
    %v996 = vsel %vm178, %v993, 0.0
    %v997 = vsel %vm179, %v995, 0.0
    %v998 = vsel %vm180, %v996, 0.0
    %v999 = vsel %vm180, %v997, 0.0
    %v1000 = vadd.f32 %v998, %v999
    %v1001 = vrot.slane %v1000, 4
    %v1002 = vadd.f32 %v1000, %v1001
    %v1003 = vrot.slane %v1002, 2
    %v1004 = vadd.f32 %v1002, %v1003
    %v1005 = vrot.slane %v1004, 1
    %v1006 = vadd.f32 %v1004, %v1005
    %v1007 = vadd.f32 %v1006, 1e-16
    %v1008 = vrcp.pop %v1007
    %v1009 = vmul.f32 %v996, %v1008
    %v1010 = vmul.f32 %v997, %v1008
    %v1011 = vmul.f32 %v1009, %v205
    %v1012 = vmul.f32 %v1010, %v205
    %v1013 = vpack.c.bf16 %v1012, %v1011
    %v1014 = vpack.c.bf16 %v1010, %v1009
    %v1016 = vsel %vm180, %v1013, 0
    %v1019 = vsel %vm180, %v1014, 0
    %1021 = vmatprep.subr.bf16.mxu0 0
    %1022 = vmatpush1.bf16.xpose.msra.mxu0 %v1019
    %1023 = vmatprep.subr.bf16.mxu0 0
    %1024 = vmatpush1.bf16.xpose.msra.mxu0 0
    %1025 = vmatprep.subr.bf16.mxu0 0
    %1026 = vmatpush1.bf16.xpose.msra.mxu0 0
    %1027 = vmatprep.subr.bf16.mxu0 0
    %1028 = vmatpush1.bf16.xpose.msra.mxu0 0
    %1029 = vmatprep.subr.bf16.mxu0 0
    %1030 = vmatpush1.bf16.xpose.msra.mxu0 0
    %1031 = vmatprep.subr.bf16.mxu0 0
    %1032 = vmatpush1.bf16.xpose.msra.mxu0 0
    %1033 = vmatprep.subr.bf16.mxu0 0
    %1034 = vmatpush1.bf16.xpose.msra.mxu0 0
    %1035 = vmatprep.subr.bf16.mxu0 0
    %1036 = vmatpush1.bf16.xpose.msra.mxu0 0
    %1037 = vmatprep.subr.bf16.mxu0 0
    %1038 = vmatpush1.bf16.xpose.msra.mxu0 0
    %1039 = vmatprep.subr.bf16.mxu0 0
    %1040 = vmatpush1.bf16.xpose.msra.mxu0 0
    %1041 = vmatprep.subr.bf16.mxu0 0
    %1042 = vmatpush1.bf16.xpose.msra.mxu0 0
    %1043 = vmatprep.subr.bf16.mxu0 0
    %1044 = vmatpush1.bf16.xpose.msra.mxu0 0
    %1045 = vmatprep.subr.bf16.mxu0 0
    %1046 = vmatpush1.bf16.xpose.msra.mxu0 0
    %1047 = vmatprep.subr.bf16.mxu0 0
    %1048 = vmatpush1.bf16.xpose.msra.mxu0 0
    %1049 = vmatprep.subr.bf16.mxu0 0
    %1050 = vmatpush1.bf16.xpose.msra.mxu0 0
    %1051 = vmatprep.subr.bf16.mxu0 0
    %1052 = vmatpush1.bf16.xpose.msra.mxu0 0
    %1053 = vmatprep.mubr.bf16.mxu0 0
    %1054 = vmatmul.mubr.bf16.gmra.mrb[0].mxu0 %v1016
    %v1055 = vpop.f32.mrb[0].mxu0
    %v1056 = vadd.f32 0.0, %v1055
    %v1057 = vpop.f32.mrb[0].mxu0
    %v1058 = vpop.f32.mrb[0].mxu0
    %v1059 = vadd.f32 0.0, %v1058
    %v1060 = vpop.f32.mrb[0].mxu0
    %1061 = vdwg.mxu0
    %v1062 = vpack.c.bf16 %v1059, %v1056
    %v1063 = vpack.c.bf16 %v860, %v857
    %v1065 = vsel %vm225, %v1062, 0
    %1067 = vmatprep.subr.bf16.mxu0 0
    %1068 = vmatpush1.bf16.msra.mxu0 %v1063
    %1069 = vmatprep.subr.bf16.mxu0 0
    %1070 = vmatpush1.bf16.msra.mxu0 0
    %1071 = vmatprep.subr.bf16.mxu0 0
    %1072 = vmatpush1.bf16.msra.mxu0 0
    %1073 = vmatprep.subr.bf16.mxu0 0
    %1074 = vmatpush1.bf16.msra.mxu0 0
    %1075 = vmatprep.subr.bf16.mxu0 0
    %1076 = vmatpush1.bf16.msra.mxu0 0
    %1077 = vmatprep.subr.bf16.mxu0 0
    %1078 = vmatpush1.bf16.msra.mxu0 0
    %1079 = vmatprep.subr.bf16.mxu0 0
    %1080 = vmatpush1.bf16.msra.mxu0 0
    %1081 = vmatprep.subr.bf16.mxu0 0
    %1082 = vmatpush1.bf16.msra.mxu0 0
    %1083 = vmatprep.subr.bf16.mxu0 0
    %1084 = vmatpush1.bf16.msra.mxu0 0
    %1085 = vmatprep.subr.bf16.mxu0 0
    %1086 = vmatpush1.bf16.msra.mxu0 0
    %1087 = vmatprep.subr.bf16.mxu0 0
    %1088 = vmatpush1.bf16.msra.mxu0 0
    %1089 = vmatprep.subr.bf16.mxu0 0
    %1090 = vmatpush1.bf16.msra.mxu0 0
    %1091 = vmatprep.subr.bf16.mxu0 0
    %1092 = vmatpush1.bf16.msra.mxu0 0
    %1093 = vmatprep.subr.bf16.mxu0 0
    %1094 = vmatpush1.bf16.msra.mxu0 0
    %1095 = vmatprep.subr.bf16.mxu0 0
    %1096 = vmatpush1.bf16.msra.mxu0 0
    %1097 = vmatprep.subr.bf16.mxu0 0
    %1098 = vmatpush1.bf16.msra.mxu0 0
    %1099 = vmatprep.mubr.bf16.mxu0 0
    %1100 = vmatmul.mubr.bf16.gmra.mrb[0].mxu0 %v1065
    %v1101 = vpop.f32.mrb[0].mxu0
    %v1102 = vadd.f32 0.0, %v1101
    %v1103 = vpop.f32.mrb[0].mxu0
    %v1104 = vpop.f32.mrb[0].mxu0
    %v1105 = vadd.f32 0.0, %v1104
    %v1106 = vpop.f32.mrb[0].mxu0
    %1107 = vdwg.mxu0
    %v1108 = vmul.f32 %v200, %v1102
    %v1109 = vmul.f32 %v201, %v1105
    %v1111 = vlaneseq
    %v1112 = vshrl.u32 %v1111, 7
    %v1113 = vsub.s32 0, %v1112
    %v1114 = vrot.slane %v819, %v1113
    %v1116 = vadd.f32 %v1108, %v1114
    %v1117 = vadd.f32 %v1109, %v1114
    %v1118 = vld [vmem:[%s33] sm:$0x1]
    %v1119 = vld [vmem:[%s35] sm:$0x1]
    %v1120 = vld [vmem:[%s37] sm:$0x1]
    %v1121 = vsel %vm284, %v1116, 0.0
    %v1122 = vsel %vm284, %v1117, 0.0
    %v1123 = vadd.f32 %v1121, %v1122
    %v1124 = vrot.slane %v1123, 4
    %v1125 = vadd.f32 %v1123, %v1124
    %v1126 = vrot.slane %v1125, 2
    %v1127 = vadd.f32 %v1125, %v1126
    %v1128 = vrot.slane %v1127, 1
    %v1129 = vadd.f32 %v1127, %v1128
    %v1130 = vmul.f32 %v1129, %v637
    %v1131 = vmul.f32 %v1130, %v1120
    %v1132 = vlaneseq
    %v1133 = vshrl.u32 %v1132, 7
    %v1134 = vsub.s32 0, %v1133
    %v1135 = vrot.slane %v1131, %v1134
    %v1136 = vsub.f32 %v1116, %v1135
    %v1137 = vsub.f32 %v1117, %v1135
    %v1138 = vmul.f32 %v1136, %v1136
    %v1139 = vmul.f32 %v1137, %v1137
    %v1140 = vsel %vm284, %v1138, 0.0
    %v1141 = vsel %vm284, %v1139, 0.0
    %v1142 = vadd.f32 %v1140, %v1141
    %v1143 = vrot.slane %v1142, 4
    %v1144 = vadd.f32 %v1142, %v1143
    %v1145 = vrot.slane %v1144, 2
    %v1146 = vadd.f32 %v1144, %v1145
    %v1147 = vrot.slane %v1146, 1
    %v1148 = vadd.f32 %v1146, %v1147
    %v1149 = vmul.f32 %v1148, %v637
    %v1151 = vlaneseq
    %v1152 = vshrl.u32 %v1151, 7
    %v1153 = vsub.s32 0, %v1152
    %v1154 = vrot.slane %v1118, %v1153
    %v1156 = vmul.f32 %v1154, %v1136
    %v1157 = vmul.f32 %v1154, %v1137
    %v1158 = vadd.f32 %v1149, 1e-05
    %v1159 = vrsqrt.pop %v1158
    %v1160 = vmul.f32 %v1156, %v1159
    %v1161 = vmul.f32 %v1157, %v1159
    %v1163 = vlaneseq
    %v1164 = vshrl.u32 %v1163, 7
    %v1165 = vsub.s32 0, %v1164
    %v1166 = vrot.slane %v1119, %v1165
    %v1168 = vadd.f32 %v1160, %v1166
    %v1169 = vadd.f32 %v1161, %v1166
    %vm1170 = vcmp.gt.f32.partialorder %v1168, 0.0
    %vm1171 = vcmp.gt.f32.partialorder %v1169, 0.0
    %v1172 = vmul.f32 %v1168, 0.01
    %v1173 = vmul.f32 %v1169, 0.01
    %v1174 = vsel %vm1170, %v1168, %v1172
    %v1175 = vsel %vm1171, %v1169, %v1173
    %v1176 = vld [vmem:[%s39] sm:$0xff]
    %v1177 = vld [vmem:[%s39 + $0x8] sm:$0xff]
    %v1178 = vld [vmem:[%s39 + $0x10] sm:$0xff]
    %v1179 = vld [vmem:[%s39 + $0x18] sm:$0xff]
    %v1180 = vpack.c.bf16 %v1175, %v1174
    %v1181 = vpack.c.bf16 %v1177, %v1176
    %v1182 = vpack.c.bf16 %v1179, %v1178
    %v1183 = vld [vmem:[%s41] sm:$0x1]
    %v1185 = vlaneseq
    %v1186 = vshrl.u32 %v1185, 7
    %v1187 = vsub.s32 0, %v1186
    %v1188 = vrot.slane %v1183, %v1187
    %v1191 = vsel %vm284, %v1180, 0
    %1193 = vmatprep.subr.bf16.mxu0 0
    %1194 = vmatpush1.bf16.msra.mxu0 %v1181
    %1195 = vmatprep.subr.bf16.mxu0 0
    %1196 = vmatpush1.bf16.msra.mxu0 %v1182
    %1197 = vmatprep.subr.bf16.mxu0 0
    %1198 = vmatpush1.bf16.msra.mxu0 0
    %1199 = vmatprep.subr.bf16.mxu0 0
    %1200 = vmatpush1.bf16.msra.mxu0 0
    %1201 = vmatprep.subr.bf16.mxu0 0
    %1202 = vmatpush1.bf16.msra.mxu0 0
    %1203 = vmatprep.subr.bf16.mxu0 0
    %1204 = vmatpush1.bf16.msra.mxu0 0
    %1205 = vmatprep.subr.bf16.mxu0 0
    %1206 = vmatpush1.bf16.msra.mxu0 0
    %1207 = vmatprep.subr.bf16.mxu0 0
    %1208 = vmatpush1.bf16.msra.mxu0 0
    %1209 = vmatprep.subr.bf16.mxu0 0
    %1210 = vmatpush1.bf16.msra.mxu0 0
    %1211 = vmatprep.subr.bf16.mxu0 0
    %1212 = vmatpush1.bf16.msra.mxu0 0
    %1213 = vmatprep.subr.bf16.mxu0 0
    %1214 = vmatpush1.bf16.msra.mxu0 0
    %1215 = vmatprep.subr.bf16.mxu0 0
    %1216 = vmatpush1.bf16.msra.mxu0 0
    %1217 = vmatprep.subr.bf16.mxu0 0
    %1218 = vmatpush1.bf16.msra.mxu0 0
    %1219 = vmatprep.subr.bf16.mxu0 0
    %1220 = vmatpush1.bf16.msra.mxu0 0
    %1221 = vmatprep.subr.bf16.mxu0 0
    %1222 = vmatpush1.bf16.msra.mxu0 0
    %1223 = vmatprep.subr.bf16.mxu0 0
    %1224 = vmatpush1.bf16.msra.mxu0 0
    %1225 = vmatprep.mubr.bf16.mxu0 0
    %1226 = vmatmul.mubr.bf16.gmra.mrb[0].mxu0 %v1191
    %v1227 = vpop.f32.mrb[0].mxu0
    %v1228 = vadd.f32 %v1188, %v1227
    %v1229 = vpop.f32.mrb[0].mxu0
    %v1230 = vpop.f32.mrb[0].mxu0
    %v1231 = vadd.f32 %v1188, %v1230
    %v1232 = vpop.f32.mrb[0].mxu0
    %1233 = vdwg.mxu0
    %vm1234 = vcmp.gt.f32.partialorder %v1228, 0.0
    %vm1235 = vcmp.gt.f32.partialorder %v1231, 0.0
    %v1236 = vmul.f32 %v1228, 0.01
    %v1237 = vmul.f32 %v1231, 0.01
    %v1238 = vsel %vm1234, %v1228, %v1236
    %v1239 = vsel %vm1235, %v1231, %v1237
    %v1240 = vpack.c.bf16 %v1239, %v1238
    %1241 = vmatprep.subr.bf16.mxu0 0
    %1242 = vmatpush1.bf16.msra.mxu0 %v1240
    %1243 = vmatprep.subr.bf16.mxu0 0
    %1244 = vmatpush1.bf16.msra.mxu0 0
    %1245 = vmatprep.subr.bf16.mxu0 0
    %1246 = vmatpush1.bf16.msra.mxu0 0
    %1247 = vmatprep.subr.bf16.mxu0 0
    %1248 = vmatpush1.bf16.msra.mxu0 0
    %1249 = vmatprep.subr.bf16.mxu0 0
    %1250 = vmatpush1.bf16.msra.mxu0 0
    %1251 = vmatprep.subr.bf16.mxu0 0
    %1252 = vmatpush1.bf16.msra.mxu0 0
    %1253 = vmatprep.subr.bf16.mxu0 0
    %1254 = vmatpush1.bf16.msra.mxu0 0
    %1255 = vmatprep.subr.bf16.mxu0 0
    %1256 = vmatpush1.bf16.msra.mxu0 0
    %1257 = vmatprep.subr.bf16.mxu0 0
    %1258 = vmatpush1.bf16.msra.mxu0 0
    %1259 = vmatprep.subr.bf16.mxu0 0
    %1260 = vmatpush1.bf16.msra.mxu0 0
    %1261 = vmatprep.subr.bf16.mxu0 0
    %1262 = vmatpush1.bf16.msra.mxu0 0
    %1263 = vmatprep.subr.bf16.mxu0 0
    %1264 = vmatpush1.bf16.msra.mxu0 0
    %1265 = vmatprep.subr.bf16.mxu0 0
    %1266 = vmatpush1.bf16.msra.mxu0 0
    %1267 = vmatprep.subr.bf16.mxu0 0
    %1268 = vmatpush1.bf16.msra.mxu0 0
    %1269 = vmatprep.subr.bf16.mxu0 0
    %1270 = vmatpush1.bf16.msra.mxu0 0
    %1271 = vmatprep.subr.bf16.mxu0 0
    %1272 = vmatpush1.bf16.msra.mxu0 0
    %1273 = vmatprep.mubr.bf16.mxu0 0
    %1274 = vmatmul.mubr.bf16.gmra.mrb[0].mxu0 %v227
    %v1275 = vpop.f32.mrb[0].mxu0
    %v1276 = vadd.f32 %v218, %v1275
    %v1277 = vpop.f32.mrb[0].mxu0
    %v1278 = vpop.f32.mrb[0].mxu0
    %v1279 = vadd.f32 %v223, %v1278
    %v1280 = vpop.f32.mrb[0].mxu0
    %1281 = vdwg.mxu0
    %v1282 = vmax.f32 %v1276, 0.0
    %v1283 = vmax.f32 %v1279, 0.0
    %v1284 = vmul.f32 %v275, %v1282
    %v1285 = vmul.f32 %v280, %v1283
    %v1286 = vsel %vm225, %v1284, 0.0
    %v1287 = vsel %vm225, %v1285, 0.0
    %v1288 = vadd.f32 %v1286, %v1287
    %v1289 = vrot.slane %v1288, 4
    %v1290 = vadd.f32 %v1288, %v1289
    %v1291 = vrot.slane %v1290, 2
    %v1292 = vadd.f32 %v1290, %v1291
    %v1293 = vrot.slane %v1292, 1
    %v1294 = vadd.f32 %v1292, %v1293
    %v1295 = vadd.f32 %v1294, %v302
    %v1296 = vand.u32 2147483647, %v1295
    %v1297 = vsub.f32 0.0, %v1296
    %v1298 = vmul.f32 %v1297, 1.442695
    %v1299 = vpow.pop %v1298
    %vm1300 = vcmp.ge.f32.partialorder %v1295, 0.0
    %v1301 = vsel %vm1300, 1.0, %v1299
    %v1302 = vadd.f32 %v1299, 1.0
    %v1303 = vrcp.pop %v1302
    %v1304 = vmul.f32 %v1301, %v1303
    %vm1305 = vcmask 253952
    %v1306 = vsel %vm1305, %v312, 0.0
    %1307 = vadd.xlane.f32.xlu0 %v1306
    %v1308 = vpop.xlane.xlu0 %1307
    %v1309 = vrot.slane %v1308, 4
    %v1310 = vadd.f32 %v1308, %v1309
    %v1311 = vrot.slane %v1310, 2
    %v1312 = vadd.f32 %v1310, %v1311
    %v1313 = vrot.slane %v1312, 1
    %v1314 = vadd.f32 %v1312, %v1313
    %s1315 = vtos %v1314
    %v1316 = vstv %s1315
    %vm1317 = vcmask 122880
    %v1318 = vsel %vm1317, %v812, 0.0
    %1319 = vadd.xlane.f32.xlu0 %v1318
    %v1320 = vpop.xlane.xlu0 %1319
    %v1321 = vrot.slane %v1320, 4
    %v1322 = vadd.f32 %v1320, %v1321
    %v1323 = vrot.slane %v1322, 2
    %v1324 = vadd.f32 %v1322, %v1323
    %v1325 = vrot.slane %v1324, 1
    %v1326 = vadd.f32 %v1324, %v1325
    %s1327 = vtos %v1326
    %v1328 = vstv %s1327
    %v1329 = vadd.f32 %v1316, %v1328
    %v1330 = vsel %vm1317, %v1304, 0.0
    %1331 = vadd.xlane.f32.xlu0 %v1330
    %v1332 = vpop.xlane.xlu0 %1331
    %v1333 = vrot.slane %v1332, 4
    %v1334 = vadd.f32 %v1332, %v1333
    %v1335 = vrot.slane %v1334, 2
    %v1336 = vadd.f32 %v1334, %v1335
    %v1337 = vrot.slane %v1336, 1
    %v1338 = vadd.f32 %v1336, %v1337
    %s1339 = vtos %v1338
    %v1340 = vstv %s1339
    %v1341 = vadd.f32 %v1329, %v1340
    %v1342 = vmul.f32 %v1341, 0.015625
    %v1343 = vsub.f32 %v312, %v1342
    %v1344 = vmul.f32 %v173, %v1343
    %v1345 = vmul.f32 %v174, %v1343
    %v1346 = vld [vmem:[%s51] sm:$0xff]
    %v1347 = vld [vmem:[%s51 + $0x8] sm:$0xff]
    %v1348 = vld [vmem:[%s51 + $0x10] sm:$0xff]
    %v1349 = vld [vmem:[%s51 + $0x18] sm:$0xff]
    %v1350 = vpack.c.bf16 %v1345, %v1344
    %v1351 = vpack.c.bf16 %v1347, %v1346
    %v1352 = vpack.c.bf16 %v1349, %v1348
    %v1353 = vsub.f32 %v812, %v1342
    %v1354 = vmul.f32 %v746, %v1353
    %v1355 = vmul.f32 %v747, %v1353
    %v1356 = vld [vmem:[%s53] sm:$0xff]
    %v1357 = vld [vmem:[%s53 + $0x8] sm:$0xff]
    %v1358 = vpack.c.bf16 %v1355, %v1354
    %v1359 = vpack.c.bf16 %v1357, %v1356
    %v1361 = vsel %vm225, %v1358, 0
    %1363 = vmatprep.subr.bf16.mxu0 0
    %1364 = vmatpush1.bf16.msra.mxu0 %v1359
    %1365 = vmatprep.subr.bf16.mxu0 0
    %1366 = vmatpush1.bf16.msra.mxu0 0
    %1367 = vmatprep.subr.bf16.mxu0 0
    %1368 = vmatpush1.bf16.msra.mxu0 0
    %1369 = vmatprep.subr.bf16.mxu0 0
    %1370 = vmatpush1.bf16.msra.mxu0 0
    %1371 = vmatprep.subr.bf16.mxu0 0
    %1372 = vmatpush1.bf16.msra.mxu0 0
    %1373 = vmatprep.subr.bf16.mxu0 0
    %1374 = vmatpush1.bf16.msra.mxu0 0
    %1375 = vmatprep.subr.bf16.mxu0 0
    %1376 = vmatpush1.bf16.msra.mxu0 0
    %1377 = vmatprep.subr.bf16.mxu0 0
    %1378 = vmatpush1.bf16.msra.mxu0 0
    %1379 = vmatprep.subr.bf16.mxu0 0
    %1380 = vmatpush1.bf16.msra.mxu0 0
    %1381 = vmatprep.subr.bf16.mxu0 0
    %1382 = vmatpush1.bf16.msra.mxu0 0
    %1383 = vmatprep.subr.bf16.mxu0 0
    %1384 = vmatpush1.bf16.msra.mxu0 0
    %1385 = vmatprep.subr.bf16.mxu0 0
    %1386 = vmatpush1.bf16.msra.mxu0 0
    %1387 = vmatprep.subr.bf16.mxu0 0
    %1388 = vmatpush1.bf16.msra.mxu0 0
    %1389 = vmatprep.subr.bf16.mxu0 0
    %1390 = vmatpush1.bf16.msra.mxu0 0
    %1391 = vmatprep.subr.bf16.mxu0 0
    %1392 = vmatpush1.bf16.msra.mxu0 0
    %1393 = vmatprep.subr.bf16.mxu0 0
    %1394 = vmatpush1.bf16.msra.mxu0 0
    %1395 = vmatprep.mubr.bf16.mxu0 0
    %1396 = vmatmul.mubr.bf16.gmra.mrb[0].mxu0 %v1361
    %v1397 = vpop.f32.mrb[0].mxu0
    %v1398 = vadd.f32 0.0, %v1397
    %v1399 = vpop.f32.mrb[0].mxu0
    %v1400 = vpop.f32.mrb[0].mxu0
    %v1401 = vadd.f32 0.0, %v1400
    %v1402 = vpop.f32.mrb[0].mxu0
    %1403 = vdwg.mxu0
    %v1405 = vsel %vm284, %v1350, 0
    %1407 = vmatprep.subr.bf16.mxu0 0
    %1408 = vmatpush1.bf16.msra.mxu0 %v1351
    %1409 = vmatprep.subr.bf16.mxu0 0
    %1410 = vmatpush1.bf16.msra.mxu0 %v1352
    %1411 = vmatprep.subr.bf16.mxu0 0
    %1412 = vmatpush1.bf16.msra.mxu0 0
    %1413 = vmatprep.subr.bf16.mxu0 0
    %1414 = vmatpush1.bf16.msra.mxu0 0
    %1415 = vmatprep.subr.bf16.mxu0 0
    %1416 = vmatpush1.bf16.msra.mxu0 0
    %1417 = vmatprep.subr.bf16.mxu0 0
    %1418 = vmatpush1.bf16.msra.mxu0 0
    %1419 = vmatprep.subr.bf16.mxu0 0
    %1420 = vmatpush1.bf16.msra.mxu0 0
    %1421 = vmatprep.subr.bf16.mxu0 0
    %1422 = vmatpush1.bf16.msra.mxu0 0
    %1423 = vmatprep.subr.bf16.mxu0 0
    %1424 = vmatpush1.bf16.msra.mxu0 0
    %1425 = vmatprep.subr.bf16.mxu0 0
    %1426 = vmatpush1.bf16.msra.mxu0 0
    %1427 = vmatprep.subr.bf16.mxu0 0
    %1428 = vmatpush1.bf16.msra.mxu0 0
    %1429 = vmatprep.subr.bf16.mxu0 0
    %1430 = vmatpush1.bf16.msra.mxu0 0
    %1431 = vmatprep.subr.bf16.mxu0 0
    %1432 = vmatpush1.bf16.msra.mxu0 0
    %1433 = vmatprep.subr.bf16.mxu0 0
    %1434 = vmatpush1.bf16.msra.mxu0 0
    %1435 = vmatprep.subr.bf16.mxu0 0
    %1436 = vmatpush1.bf16.msra.mxu0 0
    %1437 = vmatprep.subr.bf16.mxu0 0
    %1438 = vmatpush1.bf16.msra.mxu0 0
    %1439 = vmatprep.mubr.bf16.mxu0 0
    %1440 = vmatmul.mubr.bf16.gmra.mrb[0].mxu0 %v1405
    %v1441 = vpop.f32.mrb[0].mxu0
    %v1442 = vadd.f32 %v1398, %v1441
    %v1443 = vpop.f32.mrb[0].mxu0
    %v1444 = vpop.f32.mrb[0].mxu0
    %v1445 = vadd.f32 %v1401, %v1444
    %v1446 = vpop.f32.mrb[0].mxu0
    %1447 = vdwg.mxu0
    %v1448 = vsub.f32 %v1304, %v1342
    %v1449 = vmul.f32 %v1238, %v1448
    %v1450 = vmul.f32 %v1239, %v1448
    %v1451 = vld [vmem:[%s55] sm:$0xff]
    %v1452 = vld [vmem:[%s55 + $0x8] sm:$0xff]
    %v1453 = vpack.c.bf16 %v1450, %v1449
    %v1454 = vpack.c.bf16 %v1452, %v1451
    %v1456 = vsel %vm225, %v1453, 0
    %1458 = vmatprep.subr.bf16.mxu0 0
    %1459 = vmatpush1.bf16.msra.mxu0 %v1454
    %1460 = vmatprep.subr.bf16.mxu0 0
    %1461 = vmatpush1.bf16.msra.mxu0 0
    %1462 = vmatprep.subr.bf16.mxu0 0
    %1463 = vmatpush1.bf16.msra.mxu0 0
    %1464 = vmatprep.subr.bf16.mxu0 0
    %1465 = vmatpush1.bf16.msra.mxu0 0
    %1466 = vmatprep.subr.bf16.mxu0 0
    %1467 = vmatpush1.bf16.msra.mxu0 0
    %1468 = vmatprep.subr.bf16.mxu0 0
    %1469 = vmatpush1.bf16.msra.mxu0 0
    %1470 = vmatprep.subr.bf16.mxu0 0
    %1471 = vmatpush1.bf16.msra.mxu0 0
    %1472 = vmatprep.subr.bf16.mxu0 0
    %1473 = vmatpush1.bf16.msra.mxu0 0
    %1474 = vmatprep.subr.bf16.mxu0 0
    %1475 = vmatpush1.bf16.msra.mxu0 0
    %1476 = vmatprep.subr.bf16.mxu0 0
    %1477 = vmatpush1.bf16.msra.mxu0 0
    %1478 = vmatprep.subr.bf16.mxu0 0
    %1479 = vmatpush1.bf16.msra.mxu0 0
    %1480 = vmatprep.subr.bf16.mxu0 0
    %1481 = vmatpush1.bf16.msra.mxu0 0
    %1482 = vmatprep.subr.bf16.mxu0 0
    %1483 = vmatpush1.bf16.msra.mxu0 0
    %1484 = vmatprep.subr.bf16.mxu0 0
    %1485 = vmatpush1.bf16.msra.mxu0 0
    %1486 = vmatprep.subr.bf16.mxu0 0
    %1487 = vmatpush1.bf16.msra.mxu0 0
    %1488 = vmatprep.subr.bf16.mxu0 0
    %1489 = vmatpush1.bf16.msra.mxu0 0
    %1490 = vmatprep.mubr.bf16.mxu0 0
    %1491 = vmatmul.mubr.bf16.gmra.mrb[0].mxu0 %v1456
    %v1492 = vpop.f32.mrb[0].mxu0
    %v1493 = vadd.f32 0.0, %v1492
    %v1494 = vpop.f32.mrb[0].mxu0
    %v1495 = vpop.f32.mrb[0].mxu0
    %v1496 = vadd.f32 0.0, %v1495
    %v1497 = vpop.f32.mrb[0].mxu0
    %1498 = vdwg.mxu0
    %v1499 = vadd.f32 %v1442, %v1493
    %v1500 = vadd.f32 %v1445, %v1496
    %v1501 = vld [vmem:[%s57] sm:$0x1]
    %v1503 = vlaneseq
    %v1504 = vshrl.u32 %v1503, 7
    %v1505 = vsub.s32 0, %v1504
    %v1506 = vrot.slane %v1501, %v1505
    %v1508 = vadd.f32 %v1499, %v1506
    %v1509 = vadd.f32 %v1500, %v1506
    %1510 = vst [vmem:[#allocation11] sm:$0xff] %v1508
    %1511 = vst [vmem:[#allocation11 + $0x8] sm:$0xff] %v1509
    // Predicated region
    $region134: #{tpu_custom_call.1} parent=1 // pred_check
      _
    $region135: #{tpu_custom_call.1} parent=1 // pred_check_branch
      %1513 = sbr.rel (0) target = $region137
    $region136: #{tpu_custom_call.1} parent=1 // pred_region
      %s1515 = ssub.s32 256, 256
      %1516 = vsyncadd [#allocation5], %s1515
      %s1517 = sshll.u32 [#allocation11], 4
      %s1518 = int_to_ptr.vmem [resolvable:$true] %s1517
      %1523 = dma.vmem_to_hbm [thread:$0]  %s1518, 256, %s59, [#allocation5], 128, 128, 8
    $region137: #{tpu_custom_call.1} parent=1 // pred_fallthru
      _
    // Predicated region
    $region138: #{tpu_custom_call.1} parent=1 // pred_check
      _
    $region139: #{tpu_custom_call.1} parent=1 // pred_check_branch
      %1525 = sbr.rel (0) target = $region141
    $region140: #{tpu_custom_call.1} parent=1 // pred_region
      %1526 = dma.done [#allocation5], 256
    $region141: #{tpu_custom_call.1} parent=1 // pred_fallthru
      _
    %1527 = vsyncpa [#allocation4], 1
    %1528 = vsyncpa [#allocation7], 1
    %1529 = vsyncpa [#allocation10], 1
    %1530 = vsyncpa [#allocation5], 1

</llo_original>
